<compile_context>
chip_gen: v6e
topology: v6e:2x2x1
jax: 0.10.0
libtpu: 0.0.40
codegen_flags: <defaults>
</compile_context>

<pallas_src>
import functools

import jax
import jax.numpy as jnp
from jax.experimental import pallas as pl
from jax.experimental.pallas import tpu as pltpu

LANE = 128
SUBLANE = 8


def _round_up(v, m):
    return -(-v // m) * m


# ---------------------------------------------------------------------------
# Kernels: (placeholder linear+tanh sub-model -> nn.GRUCell) x gru_steps,
# whole chain fused in one kernel, hidden state carried in VMEM/vregs.
# ---------------------------------------------------------------------------
def _gru_chain_kernel_packed(x_ref, mw_ref, mb_ref, wih_ref, whh_ref,
                             brz_ref, bin_ref, bhn_ref, o_ref, *, steps, dim):
    """Dense-gate layout (3*dim <= 128): r|z|n at lanes [0:d|d:2d|2d:3d]."""
    bn, hp = x_ref.shape
    h = x_ref[...]
    o_ref[:, 0:hp] = h                                   # slot 0 = initial state

    # Hoisted broadcasts + weight loads (not re-emitted per unrolled step).
    mb = jnp.broadcast_to(mb_ref[...], (bn, hp))
    brz = jnp.broadcast_to(brz_ref[...], (bn, hp))
    b_in = jnp.broadcast_to(bin_ref[...], (bn, hp))
    b_hn = jnp.broadcast_to(bhn_ref[...], (bn, hp))
    mw = mw_ref[...]
    wih = wih_ref[...]
    whh = whh_ref[...]

    for s in range(steps):                               # static unroll
        h_bf = h.astype(jnp.bfloat16)
        # placeholder sub-model: tanh(h @ W_m + b_m)
        x_out = jnp.tanh(jnp.dot(h_bf, mw, preferred_element_type=jnp.float32) + mb)
        gi = jnp.dot(x_out.astype(jnp.bfloat16), wih,
                     preferred_element_type=jnp.float32)     # r|z|n in one tile
        gh = jnp.dot(h_bf, whh, preferred_element_type=jnp.float32)

        s_rz = jax.nn.sigmoid(gi + gh + brz)                 # r@[0:d], z@[d:2d]
        r_at_n = pltpu.roll(s_rz, shift=2 * dim, axis=1)     # r -> [2d:3d] (XLU)
        n_full = jnp.tanh(gi + b_in + r_at_n * (gh + b_hn))  # n@[2d:3d]
        n_al = pltpu.roll(n_full, shift=hp - 2 * dim, axis=1)  # n -> [0:d]
        z_al = pltpu.roll(s_rz, shift=hp - dim, axis=1)        # z -> [0:d]

        h = (1.0 - z_al) * n_al + z_al * h               # valid on lanes [0:d]
        o_ref[:, (s + 1) * hp:(s + 2) * hp] = h          # lane-dense store


def _gru_chain_kernel_general(x_ref, mw_ref, mb_ref, wrz_ref, win_ref, whn_ref,
                              brz_ref, bin_ref, bhn_ref, o_ref, *, steps):
    """General layout: fused K=2*HP r/z matmul + separate (HP,HP) n-gate dots."""
    bn, hp = x_ref.shape
    h = x_ref[...]
    o_ref[:, 0:hp] = h

    mb = jnp.broadcast_to(mb_ref[...], (bn, hp))
    brz = jnp.broadcast_to(brz_ref[...], (bn, 2 * hp))
    b_in = jnp.broadcast_to(bin_ref[...], (bn, hp))
    b_hn = jnp.broadcast_to(bhn_ref[...], (bn, hp))
    mw = mw_ref[...]
    wrz = wrz_ref[...]
    win = win_ref[...]
    whn = whn_ref[...]

    for s in range(steps):
        h_bf = h.astype(jnp.bfloat16)
        x_out = jnp.tanh(jnp.dot(h_bf, mw, preferred_element_type=jnp.float32) + mb)
        x_bf = x_out.astype(jnp.bfloat16)

        # fused r/z: K = 2*HP fills the 256-deep MXU on v6e/v7x
        xh = jnp.concatenate([x_bf, h_bf], axis=1)               # (bn, 2*HP)
        rz = jax.nn.sigmoid(jnp.dot(xh, wrz, preferred_element_type=jnp.float32)
                            + brz)                               # (bn, 2*HP)
        r = rz[:, :hp]
        z = rz[:, hp:]

        gi_n = jnp.dot(x_bf, win, preferred_element_type=jnp.float32)
        gh_n = jnp.dot(h_bf, whn, preferred_element_type=jnp.float32)
        n = jnp.tanh(gi_n + b_in + r * (gh_n + b_hn))

        h = (1.0 - z) * n + z * h
        o_ref[:, (s + 1) * hp:(s + 2) * hp] = h


# ---------------------------------------------------------------------------
# Host-side planning: generation-aware block / VMEM budgeting
# ---------------------------------------------------------------------------
def _vmem_capacity():
    try:
        cap = int(pltpu.get_tpu_info().vmem_capacity_bytes)
        if cap > 0:
            return cap
    except Exception:
        pass
    return 64 << 20   # conservative fallback (v7x per-TensorCore VMEM)


def _plan_blocks(n_rows, hp, out_w, weight_bytes):
    cap = _vmem_capacity()
    limit = cap // 2                       # above 16/32 MiB scoped defaults on v5e/v6e
    # f32 bytes per row: double-buffered state + output blocks, plus ~20 HP-wide
    # f32 intermediates (gi/gh/s_rz/... live ranges across the unrolled loop).
    per_row = 4 * (2 * (hp + out_w) + 20 * hp)
    budget = limit - 2 * weight_bytes - (2 << 20)
    max_rows = max(SUBLANE, (max(budget, 0) // per_row) // SUBLANE * SUBLANE)
    n8 = _round_up(max(n_rows, SUBLANE), SUBLANE)
    block_n = min(n8, max_rows)
    n_pad = _round_up(n8, block_n)
    limit = max(limit, 2 * weight_bytes + per_row * block_n + (4 << 20))
    return n_pad, block_n, int(limit)


# ---------------------------------------------------------------------------
# One pallas_call driving 1..C independent GRU chains (chain = grid axis 0)
# ---------------------------------------------------------------------------
def _run_chains(chains, states, steps):
    dim = states[0].shape[1]
    assert all(s.shape[1] == dim for s in states)
    p0 = chains[0]
    hp = p0["mw"].shape[-1]
    packed = "wih" in p0
    out_w = (steps + 1) * hp
    n_rows = [s.shape[0] for s in states]
    weight_bytes = sum(int(v.size * v.dtype.itemsize) for v in p0.values())
    n_pad, block_n, vmem_limit = _plan_blocks(max(n_rows), hp, out_w, weight_bytes)
    num_chains = len(chains)

    st = jnp.zeros((num_chains, n_pad, hp), jnp.float32)
    for c, s in enumerate(states):
        st = st.at[c, :s.shape[0], :dim].set(s)

    def stack(key):
        return jnp.stack([p[key] for p in chains], axis=0)

    # Resident weights: single-buffer them when they are large (v7x VMEM).
    w_kw = dict(pipeline_mode=pl.Buffered(1)) if weight_bytes > (4 << 20) else {}
    wspec = lambda r, c_: pl.BlockSpec((None, r, c_), lambda ci, bi: (ci, 0, 0), **w_kw)
    bspec = lambda c_: pl.BlockSpec((None, 1, c_), lambda ci, bi: (ci, 0, 0))
    x_spec = pl.BlockSpec((None, block_n, hp), lambda ci, bi: (ci, bi, 0))
    o_spec = pl.BlockSpec((None, block_n, out_w), lambda ci, bi: (ci, bi, 0))

    if packed:
        kernel = functools.partial(_gru_chain_kernel_packed, steps=steps, dim=dim)
        ins = (st, stack("mw"), stack("mb"), stack("wih"), stack("whh"),
               stack("brz"), stack("bin"), stack("bhn"))
        in_specs = [x_spec, wspec(hp, hp), bspec(hp), wspec(hp, hp), wspec(hp, hp),
                    bspec(hp), bspec(hp), bspec(hp)]
    else:
        kernel = functools.partial(_gru_chain_kernel_general, steps=steps)
        ins = (st, stack("mw"), stack("mb"), stack("wrz"), stack("win"), stack("whn"),
               stack("brz"), stack("bin"), stack("bhn"))
        in_specs = [x_spec, wspec(hp, hp), bspec(hp), wspec(2 * hp, 2 * hp),
                    wspec(hp, hp), wspec(hp, hp), bspec(2 * hp), bspec(hp), bspec(hp)]

    out = pl.pallas_call(
        kernel,
        out_shape=jax.ShapeDtypeStruct((num_chains, n_pad, out_w), jnp.float32),
        grid=(num_chains, n_pad // block_n),
        in_specs=in_specs,
        out_specs=o_spec,
        compiler_params=pltpu.CompilerParams(
            dimension_semantics=("parallel", "parallel"),
            vmem_limit_bytes=vmem_limit),
    )(*ins)

    results = []
    for c, n in enumerate(n_rows):
        r = out[c, :n].reshape(n, steps + 1, hp)[:, :, :dim]
        results.append(r.reshape(n, (steps + 1) * dim))
    return results


# ---------------------------------------------------------------------------
# Parameters: raw (for the reference) + kernel packing
# ---------------------------------------------------------------------------
def _uniform(key, shape, bound):
    return jax.random.uniform(key, shape, jnp.float32, minval=-bound, maxval=bound)


def init_chain_raw(key, dim):
    """GRUCell(dim, dim) + placeholder linear(dim, dim) params (unpadded f32)."""
    k1, k2, k3, k4, k5, k6 = jax.random.split(key, 6)
    bound = 1.0 / float(dim) ** 0.5      # mirrors nn.GRUCell / nn.Linear init
    return dict(
        wih=_uniform(k1, (3, dim, dim), bound),   # per-gate (r,z,n), x @ w orientation
        whh=_uniform(k2, (3, dim, dim), bound),
        bih=_uniform(k3, (3, dim), bound),
        bhh=_uniform(k4, (3, dim), bound),
        mw=_uniform(k5, (dim, dim), bound),       # placeholder sub-model
        mb=_uniform(k6, (dim,), bound),
    )


def pack_chain_params(raw):
    """Pad / repack raw params into the kernel layout (bf16 weights, f32 biases)."""
    dim = raw["mw"].shape[0]
    hp = max(_round_up(dim, LANE), LANE)
    wih, whh, bih, bhh = raw["wih"], raw["whh"], raw["bih"], raw["bhh"]
    mw_p = jnp.zeros((hp, hp), jnp.float32).at[:dim, :dim].set(raw["mw"])
    mb_p = jnp.zeros((1, hp), jnp.float32).at[0, :dim].set(raw["mb"])

    if 3 * dim <= LANE:
        # Dense packing: gates r|z|n at lane offsets 0, dim, 2*dim in ONE tile.
        def pack_w(w):
            out = jnp.zeros((hp, hp), jnp.float32)
            for g in range(3):
                out = out.at[:dim, g * dim:(g + 1) * dim].set(w[g])
            return out
        brz = jnp.zeros((1, hp), jnp.float32)
        brz = brz.at[0, 0:dim].set(bih[0] + bhh[0])
        brz = brz.at[0, dim:2 * dim].set(bih[1] + bhh[1])
        b_in = jnp.zeros((1, hp), jnp.float32).at[0, 2 * dim:3 * dim].set(bih[2])
        b_hn = jnp.zeros((1, hp), jnp.float32).at[0, 2 * dim:3 * dim].set(bhh[2])
        return dict(mw=mw_p.astype(jnp.bfloat16), mb=mb_p,
                    wih=pack_w(wih).astype(jnp.bfloat16),
                    whh=pack_w(whh).astype(jnp.bfloat16),
                    brz=brz, bin=b_in, bhn=b_hn)

    # General layout: r|z stacked vertically for one fused K=2*HP matmul over
    # concat([x_out, h]); the n gate stays separate.
    wrz = jnp.zeros((2 * hp, 2 * hp), jnp.float32)
    wrz = wrz.at[:dim, :dim].set(wih[0])
    wrz = wrz.at[:dim, hp:hp + dim].set(wih[1])
    wrz = wrz.at[hp:hp + dim, :dim].set(whh[0])
    wrz = wrz.at[hp:hp + dim, hp:hp + dim].set(whh[1])
    win = jnp.zeros((hp, hp), jnp.float32).at[:dim, :dim].set(wih[2])
    whn = jnp.zeros((hp, hp), jnp.float32).at[:dim, :dim].set(whh[2])
    brz = jnp.zeros((1, 2 * hp), jnp.float32)
    brz = brz.at[0, :dim].set(bih[0] + bhh[0])
    brz = brz.at[0, hp:hp + dim].set(bih[1] + bhh[1])
    b_in = jnp.zeros((1, hp), jnp.float32).at[0, :dim].set(bih[2])
    b_hn = jnp.zeros((1, hp), jnp.float32).at[0, :dim].set(bhh[2])
    return dict(mw=mw_p.astype(jnp.bfloat16), mb=mb_p,
                wrz=wrz.astype(jnp.bfloat16),
                win=win.astype(jnp.bfloat16), whn=whn.astype(jnp.bfloat16),
                brz=brz, bin=b_in, bhn=b_hn)


def chain_reference(raw, state, steps):
    """Pure-JAX reference with the same bf16-matmul / f32-accumulate recipe."""
    bf = lambda a: a.astype(jnp.bfloat16)
    dotf = lambda a, b: jnp.dot(a, b, preferred_element_type=jnp.float32)
    h = state
    outs = [h]
    for _ in range(steps):
        hb = bf(h)
        x_out = jnp.tanh(dotf(hb, bf(raw["mw"])) + raw["mb"])
        xb = bf(x_out)
        r = jax.nn.sigmoid(dotf(xb, bf(raw["wih"][0])) + raw["bih"][0]
                           + dotf(hb, bf(raw["whh"][0])) + raw["bhh"][0])
        z = jax.nn.sigmoid(dotf(xb, bf(raw["wih"][1])) + raw["bih"][1]
                           + dotf(hb, bf(raw["whh"][1])) + raw["bhh"][1])
        n = jnp.tanh(dotf(xb, bf(raw["wih"][2])) + raw["bih"][2]
                     + r * (dotf(hb, bf(raw["whh"][2])) + raw["bhh"][2]))
        h = (1.0 - z) * n + z * h
        outs.append(h)
    return jnp.concatenate(outs, axis=1)


# ---------------------------------------------------------------------------
# MetaGRU forward
# ---------------------------------------------------------------------------
@functools.partial(jax.jit, static_argnames=("gru_steps",))
def meta_gru_forward(params, x, edge_index, u, batch, gru_steps):
    """Mirrors MetaGRU.forward with edge_attr=None (default edge_model=None)."""
    del edge_index, batch  # consumed only by the (placeholder) sub-models
    node_p, glob_p = params["node"], params["glob"]
    if x.shape[1] == u.shape[1] and set(node_p) == set(glob_p):
        # Single fused launch: both chains share one kernel via the chain grid axis.
        x_cat_out, global_out = _run_chains([node_p, glob_p], [x, u], gru_steps)
    else:
        (x_cat_out,) = _run_chains([node_p], [x], gru_steps)
        (global_out,) = _run_chains([glob_p], [u], gru_steps)
    return x_cat_out, global_out


# ---------------------------------------------------------------------------
# Demo
# ---------------------------------------------------------------------------
if __name__ == "__main__":
    gru_steps = 3
    num_nodes = 8
    num_edges = 16
    num_graphs = 2
    x_hs = 32
    u_hs = 32
    e_hs = 32  # unused: edge_model defaults to None, so edge_rnn path is skipped

    key = jax.random.PRNGKey(0)
    k_node, k_glob, k_x, k_u, k_ei = jax.random.split(key, 5)

    raw_node = init_chain_raw(k_node, x_hs)
    raw_glob = init_chain_raw(k_glob, u_hs)
    params = dict(node=pack_chain_params(raw_node), glob=pack_chain_params(raw_glob))

    x = jax.random.normal(k_x, (num_nodes, x_hs), jnp.float32)
    u = jax.random.normal(k_u, (num_graphs, u_hs), jnp.float32)
    edge_index = jax.random.randint(k_ei, (2, num_edges), 0, num_nodes, jnp.int32)
    batch = jnp.concatenate([jnp.zeros((num_nodes // 2,), jnp.int32),
                             jnp.ones((num_nodes // 2,), jnp.int32)])

    x_cat_out, global_out = meta_gru_forward(
        params, x, edge_index, u, batch, gru_steps=gru_steps)
    jax.block_until_ready((x_cat_out, global_out))

    assert x_cat_out.shape == (num_nodes, x_hs * (gru_steps + 1))
    assert global_out.shape == (num_graphs, u_hs * (gru_steps + 1))
    assert bool(jnp.all(jnp.isfinite(x_cat_out))) and bool(jnp.all(jnp.isfinite(global_out)))
    # first slot of the concatenated output is the unmodified initial state
    assert bool(jnp.allclose(x_cat_out[:, :x_hs], x))
    assert bool(jnp.allclose(global_out[:, :u_hs], u))

    # numerical check vs pure-JAX reference (same bf16/f32 recipe as the kernel)
    ref_x = chain_reference(raw_node, x, gru_steps)
    ref_u = chain_reference(raw_glob, u, gru_steps)
    assert bool(jnp.allclose(x_cat_out, ref_x, atol=2e-2, rtol=2e-2))
    assert bool(jnp.allclose(global_out, ref_u, atol=2e-2, rtol=2e-2))

    print("KERNEL_OK")
</pallas_src>

<mosaic_0001>
module attributes {stable_mosaic.version = 11 : i64} {
  func.func @_gru_chain_kernel_packed(%arg0: i32, %arg1: i32, %arg2: memref<1x8x128xf32, #tpu.memory_space<vmem>>, %arg3: memref<1x128x128xbf16, #tpu.memory_space<vmem>>, %arg4: memref<1x1x128xf32, #tpu.memory_space<vmem>>, %arg5: memref<1x128x128xbf16, #tpu.memory_space<vmem>>, %arg6: memref<1x128x128xbf16, #tpu.memory_space<vmem>>, %arg7: memref<1x1x128xf32, #tpu.memory_space<vmem>>, %arg8: memref<1x1x128xf32, #tpu.memory_space<vmem>>, %arg9: memref<1x1x128xf32, #tpu.memory_space<vmem>>, %arg10: memref<1x8x512xf32, #tpu.memory_space<vmem>>) attributes {dimension_semantics = [#tpu.dimension_semantics<parallel>, #tpu.dimension_semantics<parallel>], iteration_bounds = array<i64: 2, 1>, scalar_prefetch = 0 : i64, scratch_operands = 0 : i64, tpu.core_type = #tpu.core_type<tc>, window_params = [{transform_indices = @transform_0, window_bounds = array<i64: 1, 8, 128>}, {transform_indices = @transform_1, window_bounds = array<i64: 1, 128, 128>}, {transform_indices = @transform_2, window_bounds = array<i64: 1, 1, 128>}, {transform_indices = @transform_3, window_bounds = array<i64: 1, 128, 128>}, {transform_indices = @transform_4, window_bounds = array<i64: 1, 128, 128>}, {transform_indices = @transform_5, window_bounds = array<i64: 1, 1, 128>}, {transform_indices = @transform_6, window_bounds = array<i64: 1, 1, 128>}, {transform_indices = @transform_7, window_bounds = array<i64: 1, 1, 128>}, {transform_indices = @transform_8, window_bounds = array<i64: 1, 8, 512>}]} {
    %c0 = arith.constant 0 : index
    %c0_0 = arith.constant 0 : index
    %c0_1 = arith.constant 0 : index
    %0 = vector.load %arg2[%c0, %c0_0, %c0_1] : memref<1x8x128xf32, #tpu.memory_space<vmem>>, vector<1x8x128xf32>
    %1 = vector.shape_cast %0 : vector<1x8x128xf32> to vector<8x128xf32>
    %c0_2 = arith.constant 0 : index
    %c0_3 = arith.constant 0 : index
    %c0_4 = arith.constant 0 : index
    %2 = vector.load %arg10[%c0_2, %c0_3, %c0_4] : memref<1x8x512xf32, #tpu.memory_space<vmem>>, vector<1x8x128xf32>
    %3 = vector.shape_cast %2 : vector<1x8x128xf32> to vector<8x128xf32>
    %4 = vector.shape_cast %1 : vector<8x128xf32> to vector<1x8x128xf32>
    tpu.vector_store %arg10[%c0_2, %c0_3, %c0_4], %4 {strides = array<i32>} : memref<1x8x512xf32, #tpu.memory_space<vmem>>, vector<1x8x128xf32>,
    %c0_5 = arith.constant 0 : index
    %c0_6 = arith.constant 0 : index
    %c0_7 = arith.constant 0 : index
    %5 = vector.load %arg4[%c0_5, %c0_6, %c0_7] : memref<1x1x128xf32, #tpu.memory_space<vmem>>, vector<1x1x128xf32>
    %6 = vector.shape_cast %5 : vector<1x1x128xf32> to vector<1x128xf32>
    %7 = vector.shape_cast %6 : vector<1x128xf32> to vector<1x128xf32>
    %8 = vector.broadcast %7 : vector<1x128xf32> to vector<8x128xf32>
    %c0_8 = arith.constant 0 : index
    %c0_9 = arith.constant 0 : index
    %c0_10 = arith.constant 0 : index
    %9 = vector.load %arg7[%c0_8, %c0_9, %c0_10] : memref<1x1x128xf32, #tpu.memory_space<vmem>>, vector<1x1x128xf32>
    %10 = vector.shape_cast %9 : vector<1x1x128xf32> to vector<1x128xf32>
    %11 = vector.shape_cast %10 : vector<1x128xf32> to vector<1x128xf32>
    %12 = vector.broadcast %11 : vector<1x128xf32> to vector<8x128xf32>
    %c0_11 = arith.constant 0 : index
    %c0_12 = arith.constant 0 : index
    %c0_13 = arith.constant 0 : index
    %13 = vector.load %arg8[%c0_11, %c0_12, %c0_13] : memref<1x1x128xf32, #tpu.memory_space<vmem>>, vector<1x1x128xf32>
    %14 = vector.shape_cast %13 : vector<1x1x128xf32> to vector<1x128xf32>
    %15 = vector.shape_cast %14 : vector<1x128xf32> to vector<1x128xf32>
    %16 = vector.broadcast %15 : vector<1x128xf32> to vector<8x128xf32>
    %c0_14 = arith.constant 0 : index
    %c0_15 = arith.constant 0 : index
    %c0_16 = arith.constant 0 : index
    %17 = vector.load %arg9[%c0_14, %c0_15, %c0_16] : memref<1x1x128xf32, #tpu.memory_space<vmem>>, vector<1x1x128xf32>
    %18 = vector.shape_cast %17 : vector<1x1x128xf32> to vector<1x128xf32>
    %19 = vector.shape_cast %18 : vector<1x128xf32> to vector<1x128xf32>
    %20 = vector.broadcast %19 : vector<1x128xf32> to vector<8x128xf32>
    %c0_17 = arith.constant 0 : index
    %c0_18 = arith.constant 0 : index
    %c0_19 = arith.constant 0 : index
    %21 = vector.load %arg3[%c0_17, %c0_18, %c0_19] : memref<1x128x128xbf16, #tpu.memory_space<vmem>>, vector<1x128x128xbf16>
    %22 = vector.shape_cast %21 : vector<1x128x128xbf16> to vector<128x128xbf16>
    %c0_20 = arith.constant 0 : index
    %c0_21 = arith.constant 0 : index
    %c0_22 = arith.constant 0 : index
    %23 = vector.load %arg5[%c0_20, %c0_21, %c0_22] : memref<1x128x128xbf16, #tpu.memory_space<vmem>>, vector<1x128x128xbf16>
    %24 = vector.shape_cast %23 : vector<1x128x128xbf16> to vector<128x128xbf16>
    %c0_23 = arith.constant 0 : index
    %c0_24 = arith.constant 0 : index
    %c0_25 = arith.constant 0 : index
    %25 = vector.load %arg6[%c0_23, %c0_24, %c0_25] : memref<1x128x128xbf16, #tpu.memory_space<vmem>>, vector<1x128x128xbf16>
    %26 = vector.shape_cast %25 : vector<1x128x128xbf16> to vector<128x128xbf16>
    %27 = arith.truncf %1 : vector<8x128xf32> to vector<8x128xbf16>
    %cst = arith.constant dense<0.000000e+00> : vector<8x128xf32>
    %28 = tpu.matmul %27, %22, %cst {dimension_numbers = #tpu.dot_dimension_numbers<[1], [0], [0], [1], [0, 0, 1, 1], [], []>} : vector<8x128xbf16>, vector<128x128xbf16>, vector<8x128xf32> -> vector<8x128xf32>
    %29 = arith.addf %28, %8 : vector<8x128xf32>
    %30 = math.tanh %29 : vector<8x128xf32>
    %31 = arith.truncf %30 : vector<8x128xf32> to vector<8x128xbf16>
    %cst_26 = arith.constant dense<0.000000e+00> : vector<8x128xf32>
    %32 = tpu.matmul %31, %24, %cst_26 {dimension_numbers = #tpu.dot_dimension_numbers<[1], [0], [0], [1], [0, 0, 1, 1], [], []>} : vector<8x128xbf16>, vector<128x128xbf16>, vector<8x128xf32> -> vector<8x128xf32>
    %cst_27 = arith.constant dense<0.000000e+00> : vector<8x128xf32>
    %33 = tpu.matmul %27, %26, %cst_27 {dimension_numbers = #tpu.dot_dimension_numbers<[1], [0], [0], [1], [0, 0, 1, 1], [], []>} : vector<8x128xbf16>, vector<128x128xbf16>, vector<8x128xf32> -> vector<8x128xf32>
    %34 = arith.addf %32, %33 : vector<8x128xf32>
    %35 = arith.addf %34, %12 : vector<8x128xf32>
    %36 = arith.negf %35 : vector<8x128xf32>
    %37 = math.exp %36 : vector<8x128xf32>
    %cst_28 = arith.constant 1.000000e+00 : f32
    %38 = vector.broadcast %cst_28 : f32 to vector<8x128xf32>
    %39 = arith.addf %38, %37 : vector<8x128xf32>
    %40 = arith.divf %38, %39 : vector<8x128xf32>
    %c64_i32 = arith.constant 64 : i32
    %41 = tpu.dynamic_rotate %40 by %c64_i32 dim 1 : vector<8x128xf32>, i32 -> vector<8x128xf32>
    %42 = arith.addf %32, %16 : vector<8x128xf32>
    %43 = arith.addf %33, %20 : vector<8x128xf32>
    %44 = arith.mulf %41, %43 : vector<8x128xf32>
    %45 = arith.addf %42, %44 : vector<8x128xf32>
    %46 = math.tanh %45 : vector<8x128xf32>
    %c64_i32_29 = arith.constant 64 : i32
    %47 = tpu.dynamic_rotate %46 by %c64_i32_29 dim 1 : vector<8x128xf32>, i32 -> vector<8x128xf32>
    %c96_i32 = arith.constant 96 : i32
    %48 = tpu.dynamic_rotate %40 by %c96_i32 dim 1 : vector<8x128xf32>, i32 -> vector<8x128xf32>
    %cst_30 = arith.constant 1.000000e+00 : f32
    %49 = vector.broadcast %cst_30 : f32 to vector<8x128xf32>
    %50 = arith.subf %49, %48 : vector<8x128xf32>
    %51 = arith.mulf %50, %47 : vector<8x128xf32>
    %52 = arith.mulf %48, %1 : vector<8x128xf32>
    %53 = arith.addf %51, %52 : vector<8x128xf32>
    %c0_31 = arith.constant 0 : index
    %c0_32 = arith.constant 0 : index
    %c128 = arith.constant 128 : index
    %54 = vector.load %arg10[%c0_31, %c0_32, %c128] : memref<1x8x512xf32, #tpu.memory_space<vmem>>, vector<1x8x128xf32>
    %55 = vector.shape_cast %54 : vector<1x8x128xf32> to vector<8x128xf32>
    %56 = vector.shape_cast %53 : vector<8x128xf32> to vector<1x8x128xf32>
    tpu.vector_store %arg10[%c0_31, %c0_32, %c128], %56 {strides = array<i32>} : memref<1x8x512xf32, #tpu.memory_space<vmem>>, vector<1x8x128xf32>,
    %57 = arith.truncf %53 : vector<8x128xf32> to vector<8x128xbf16>
    %cst_33 = arith.constant dense<0.000000e+00> : vector<8x128xf32>
    %58 = tpu.matmul %57, %22, %cst_33 {dimension_numbers = #tpu.dot_dimension_numbers<[1], [0], [0], [1], [0, 0, 1, 1], [], []>} : vector<8x128xbf16>, vector<128x128xbf16>, vector<8x128xf32> -> vector<8x128xf32>
    %59 = arith.addf %58, %8 : vector<8x128xf32>
    %60 = math.tanh %59 : vector<8x128xf32>
    %61 = arith.truncf %60 : vector<8x128xf32> to vector<8x128xbf16>
    %cst_34 = arith.constant dense<0.000000e+00> : vector<8x128xf32>
    %62 = tpu.matmul %61, %24, %cst_34 {dimension_numbers = #tpu.dot_dimension_numbers<[1], [0], [0], [1], [0, 0, 1, 1], [], []>} : vector<8x128xbf16>, vector<128x128xbf16>, vector<8x128xf32> -> vector<8x128xf32>
    %cst_35 = arith.constant dense<0.000000e+00> : vector<8x128xf32>
    %63 = tpu.matmul %57, %26, %cst_35 {dimension_numbers = #tpu.dot_dimension_numbers<[1], [0], [0], [1], [0, 0, 1, 1], [], []>} : vector<8x128xbf16>, vector<128x128xbf16>, vector<8x128xf32> -> vector<8x128xf32>
    %64 = arith.addf %62, %63 : vector<8x128xf32>
    %65 = arith.addf %64, %12 : vector<8x128xf32>
    %66 = arith.negf %65 : vector<8x128xf32>
    %67 = math.exp %66 : vector<8x128xf32>
    %cst_36 = arith.constant 1.000000e+00 : f32
    %68 = vector.broadcast %cst_36 : f32 to vector<8x128xf32>
    %69 = arith.addf %68, %67 : vector<8x128xf32>
    %70 = arith.divf %68, %69 : vector<8x128xf32>
    %c64_i32_37 = arith.constant 64 : i32
    %71 = tpu.dynamic_rotate %70 by %c64_i32_37 dim 1 : vector<8x128xf32>, i32 -> vector<8x128xf32>
    %72 = arith.addf %62, %16 : vector<8x128xf32>
    %73 = arith.addf %63, %20 : vector<8x128xf32>
    %74 = arith.mulf %71, %73 : vector<8x128xf32>
    %75 = arith.addf %72, %74 : vector<8x128xf32>
    %76 = math.tanh %75 : vector<8x128xf32>
    %c64_i32_38 = arith.constant 64 : i32
    %77 = tpu.dynamic_rotate %76 by %c64_i32_38 dim 1 : vector<8x128xf32>, i32 -> vector<8x128xf32>
    %c96_i32_39 = arith.constant 96 : i32
    %78 = tpu.dynamic_rotate %70 by %c96_i32_39 dim 1 : vector<8x128xf32>, i32 -> vector<8x128xf32>
    %cst_40 = arith.constant 1.000000e+00 : f32
    %79 = vector.broadcast %cst_40 : f32 to vector<8x128xf32>
    %80 = arith.subf %79, %78 : vector<8x128xf32>
    %81 = arith.mulf %80, %77 : vector<8x128xf32>
    %82 = arith.mulf %78, %53 : vector<8x128xf32>
    %83 = arith.addf %81, %82 : vector<8x128xf32>
    %c0_41 = arith.constant 0 : index
    %c0_42 = arith.constant 0 : index
    %c256 = arith.constant 256 : index
    %84 = vector.load %arg10[%c0_41, %c0_42, %c256] : memref<1x8x512xf32, #tpu.memory_space<vmem>>, vector<1x8x128xf32>
    %85 = vector.shape_cast %84 : vector<1x8x128xf32> to vector<8x128xf32>
    %86 = vector.shape_cast %83 : vector<8x128xf32> to vector<1x8x128xf32>
    tpu.vector_store %arg10[%c0_41, %c0_42, %c256], %86 {strides = array<i32>} : memref<1x8x512xf32, #tpu.memory_space<vmem>>, vector<1x8x128xf32>,
    %87 = arith.truncf %83 : vector<8x128xf32> to vector<8x128xbf16>
    %cst_43 = arith.constant dense<0.000000e+00> : vector<8x128xf32>
    %88 = tpu.matmul %87, %22, %cst_43 {dimension_numbers = #tpu.dot_dimension_numbers<[1], [0], [0], [1], [0, 0, 1, 1], [], []>} : vector<8x128xbf16>, vector<128x128xbf16>, vector<8x128xf32> -> vector<8x128xf32>
    %89 = arith.addf %88, %8 : vector<8x128xf32>
    %90 = math.tanh %89 : vector<8x128xf32>
    %91 = arith.truncf %90 : vector<8x128xf32> to vector<8x128xbf16>
    %cst_44 = arith.constant dense<0.000000e+00> : vector<8x128xf32>
    %92 = tpu.matmul %91, %24, %cst_44 {dimension_numbers = #tpu.dot_dimension_numbers<[1], [0], [0], [1], [0, 0, 1, 1], [], []>} : vector<8x128xbf16>, vector<128x128xbf16>, vector<8x128xf32> -> vector<8x128xf32>
    %cst_45 = arith.constant dense<0.000000e+00> : vector<8x128xf32>
    %93 = tpu.matmul %87, %26, %cst_45 {dimension_numbers = #tpu.dot_dimension_numbers<[1], [0], [0], [1], [0, 0, 1, 1], [], []>} : vector<8x128xbf16>, vector<128x128xbf16>, vector<8x128xf32> -> vector<8x128xf32>
    %94 = arith.addf %92, %93 : vector<8x128xf32>
    %95 = arith.addf %94, %12 : vector<8x128xf32>
    %96 = arith.negf %95 : vector<8x128xf32>
    %97 = math.exp %96 : vector<8x128xf32>
    %cst_46 = arith.constant 1.000000e+00 : f32
    %98 = vector.broadcast %cst_46 : f32 to vector<8x128xf32>
    %99 = arith.addf %98, %97 : vector<8x128xf32>
    %100 = arith.divf %98, %99 : vector<8x128xf32>
    %c64_i32_47 = arith.constant 64 : i32
    %101 = tpu.dynamic_rotate %100 by %c64_i32_47 dim 1 : vector<8x128xf32>, i32 -> vector<8x128xf32>
    %102 = arith.addf %92, %16 : vector<8x128xf32>
    %103 = arith.addf %93, %20 : vector<8x128xf32>
    %104 = arith.mulf %101, %103 : vector<8x128xf32>
    %105 = arith.addf %102, %104 : vector<8x128xf32>
    %106 = math.tanh %105 : vector<8x128xf32>
    %c64_i32_48 = arith.constant 64 : i32
    %107 = tpu.dynamic_rotate %106 by %c64_i32_48 dim 1 : vector<8x128xf32>, i32 -> vector<8x128xf32>
    %c96_i32_49 = arith.constant 96 : i32
    %108 = tpu.dynamic_rotate %100 by %c96_i32_49 dim 1 : vector<8x128xf32>, i32 -> vector<8x128xf32>
    %cst_50 = arith.constant 1.000000e+00 : f32
    %109 = vector.broadcast %cst_50 : f32 to vector<8x128xf32>
    %110 = arith.subf %109, %108 : vector<8x128xf32>
    %111 = arith.mulf %110, %107 : vector<8x128xf32>
    %112 = arith.mulf %108, %83 : vector<8x128xf32>
    %113 = arith.addf %111, %112 : vector<8x128xf32>
    %c0_51 = arith.constant 0 : index
    %c0_52 = arith.constant 0 : index
    %c384 = arith.constant 384 : index
    %114 = vector.load %arg10[%c0_51, %c0_52, %c384] : memref<1x8x512xf32, #tpu.memory_space<vmem>>, vector<1x8x128xf32>
    %115 = vector.shape_cast %114 : vector<1x8x128xf32> to vector<8x128xf32>
    %116 = vector.shape_cast %113 : vector<8x128xf32> to vector<1x8x128xf32>
    tpu.vector_store %arg10[%c0_51, %c0_52, %c384], %116 {strides = array<i32>} : memref<1x8x512xf32, #tpu.memory_space<vmem>>, vector<1x8x128xf32>,
    return
  }
  func.func @transform_0(%arg0: i32, %arg1: i32) -> (i32, i32, i32) {
    %c0_i32 = arith.constant 0 : i32
    %c0_i32_0 = arith.constant 0 : i32
    return %arg0, %arg1, %c0_i32 : i32, i32, i32
  }
  func.func @transform_1(%arg0: i32, %arg1: i32) -> (i32, i32, i32) {
    %c0_i32 = arith.constant 0 : i32
    %c0_i32_0 = arith.constant 0 : i32
    %c0_i32_1 = arith.constant 0 : i32
    return %arg0, %c0_i32, %c0_i32_0 : i32, i32, i32
  }
  func.func @transform_2(%arg0: i32, %arg1: i32) -> (i32, i32, i32) {
    %c0_i32 = arith.constant 0 : i32
    %c0_i32_0 = arith.constant 0 : i32
    %c0_i32_1 = arith.constant 0 : i32
    return %arg0, %c0_i32, %c0_i32_0 : i32, i32, i32
  }
  func.func @transform_3(%arg0: i32, %arg1: i32) -> (i32, i32, i32) {
    %c0_i32 = arith.constant 0 : i32
    %c0_i32_0 = arith.constant 0 : i32
    %c0_i32_1 = arith.constant 0 : i32
    return %arg0, %c0_i32, %c0_i32_0 : i32, i32, i32
  }
  func.func @transform_4(%arg0: i32, %arg1: i32) -> (i32, i32, i32) {
    %c0_i32 = arith.constant 0 : i32
    %c0_i32_0 = arith.constant 0 : i32
    %c0_i32_1 = arith.constant 0 : i32
    return %arg0, %c0_i32, %c0_i32_0 : i32, i32, i32
  }
  func.func @transform_5(%arg0: i32, %arg1: i32) -> (i32, i32, i32) {
    %c0_i32 = arith.constant 0 : i32
    %c0_i32_0 = arith.constant 0 : i32
    %c0_i32_1 = arith.constant 0 : i32
    return %arg0, %c0_i32, %c0_i32_0 : i32, i32, i32
  }
  func.func @transform_6(%arg0: i32, %arg1: i32) -> (i32, i32, i32) {
    %c0_i32 = arith.constant 0 : i32
    %c0_i32_0 = arith.constant 0 : i32
    %c0_i32_1 = arith.constant 0 : i32
    return %arg0, %c0_i32, %c0_i32_0 : i32, i32, i32
  }
  func.func @transform_7(%arg0: i32, %arg1: i32) -> (i32, i32, i32) {
    %c0_i32 = arith.constant 0 : i32
    %c0_i32_0 = arith.constant 0 : i32
    %c0_i32_1 = arith.constant 0 : i32
    return %arg0, %c0_i32, %c0_i32_0 : i32, i32, i32
  }
  func.func @transform_8(%arg0: i32, %arg1: i32) -> (i32, i32, i32) {
    %c0_i32 = arith.constant 0 : i32
    %c0_i32_0 = arith.constant 0 : i32
    return %arg0, %arg1, %c0_i32 : i32, i32, i32
  }
}

</mosaic_0001>

<llo_original>
// kernel: squeeze.3
$region0: #{squeeze.3}
  %s0 = inlined_call_operand.vmem [shape: f32[1,2,512], index: 0, kind: input, shape index: {}]
  %s1 = inlined_call_operand.vmem [shape: f32[2,4,128], index: 1, kind: output, shape index: {}]
  $region1: #{squeeze.3} parent=0
    #allocation0 [shape = 'u8[8192]{0}', space=vmem, size = 0x2000, scoped, tag = 'scoped mem for output reshape']
    #allocation1 [shape = 'u8[16384]{0}', space=vmem, size = 0x4000, scoped, tag = 'scoped mem for input reshape']
    %s3 = sshll.u32 1, 2
    %s4 = ssub.s32 %s3, 1
    %s5 = smul.addr 2, 3
    %s6 = scalar_lea.vmem %s0, %s5
    %v7 = vld [vmem:[%s6] sm:%s4]
    %s8 = scalar_lea.vmem [#allocation1], 24
    %9 = vst [vmem:[%s8] sm:%s4] %v7
    %s10 = smul.addr 2, 2
    %s11 = scalar_lea.vmem %s0, %s10
    %v12 = vld [vmem:[%s11] sm:%s4]
    %s13 = scalar_lea.vmem [#allocation1], 16
    %14 = vst [vmem:[%s13] sm:%s4] %v12
    %s15 = scalar_lea.vmem %s0, 2
    %v16 = vld [vmem:[%s15] sm:%s4]
    %s17 = scalar_lea.vmem [#allocation1], 8
    %18 = vst [vmem:[%s17] sm:%s4] %v16
    %v19 = vld [vmem:[%s0] sm:%s4]
    %20 = vst [vmem:[#allocation1] sm:%s4] %v19
    %v21 = vld [vmem:[#allocation1] sm:$0x3]
    %22 = vst [vmem:[#allocation0] ss:$8 sm:$0x3] %v21
    %s23 = scalar_lea.vmem [#allocation1], 8
    %v24 = vld [vmem:[%s23] sm:$0x3]
    %s25 = scalar_lea.vmem [#allocation0], 1
    %26 = vst [vmem:[%s25] ss:$8 sm:$0x3] %v24
    %s27 = scalar_lea.vmem [#allocation1], 16
    %v28 = vld [vmem:[%s27] sm:$0x3]
    %s29 = scalar_lea.vmem [#allocation0], 2
    %30 = vst [vmem:[%s29] ss:$8 sm:$0x3] %v28
    %s31 = scalar_lea.vmem [#allocation1], 24
    %v32 = vld [vmem:[%s31] sm:$0x3]
    %s33 = scalar_lea.vmem [#allocation0], 3
    %34 = vst [vmem:[%s33] ss:$8 sm:$0x3] %v32
    %s36 = sshll.u32 1, 4
    %s37 = ssub.s32 %s36, 1
    %v39 = vld [vmem:[#allocation0] sm:%s37]
    %s40 = sshll.u32 1, 4
    %s41 = ssub.s32 %s40, 1
    %42 = vst [vmem:[%s1] sm:%s41] %v39
    %s43 = scalar_lea.vmem [#allocation0], 8
    %v44 = vld [vmem:[%s43] sm:%s37]
    %s45 = sshll.u32 1, 4
    %s46 = ssub.s32 %s45, 1
    %s47 = scalar_lea.vmem %s1, 4
    %48 = vst [vmem:[%s47] sm:%s46] %v44

// kernel: meta_gru_forward.1
$region0: #{meta_gru_forward.1}
  #allocation0 [shape = 'u32[]', space=smem, size = 0x4, offset = 0x4, fixed_abs, tag = 'smem constant byte address 0x4 - core index']
  #allocation1 [shape = 'u32[144,128]{1,0:T(1,128)}', space=vmem, size = 0x12000, scoped, tag = 'internal scratch']
  %s0 = inlined_call_operand.vmem [shape: f32[2,8,128], index: 0, kind: input, shape index: {}]
  %s1 = inlined_call_operand.vmem [shape: bf16[2,128,128], index: 1, kind: input, shape index: {}]
  %s2 = inlined_call_operand.vmem [shape: f32[2,1,128], index: 2, kind: input, shape index: {}]
  %s3 = inlined_call_operand.vmem [shape: bf16[2,128,128], index: 3, kind: input, shape index: {}]
  %s4 = inlined_call_operand.vmem [shape: bf16[2,128,128], index: 4, kind: input, shape index: {}]
  %s5 = inlined_call_operand.vmem [shape: f32[2,1,128], index: 5, kind: input, shape index: {}]
  %s6 = inlined_call_operand.vmem [shape: f32[2,1,128], index: 6, kind: input, shape index: {}]
  %s7 = inlined_call_operand.vmem [shape: f32[2,1,128], index: 7, kind: input, shape index: {}]
  %s8 = inlined_call_operand.vmem [shape: f32[2,8,512], index: 8, kind: output, shape index: {}]
  %s9 = sld [smem:[#allocation0]]
  $region65: #{meta_gru_forward.1} parent=0
    _
  %s11 = ssub.s32 1, %s9
  %s12 = scalar_select 0, %s11, %s9
  loop: start=0, step=1, limit=4
  $region2: #{meta_gru_forward.1} parent=0 // loop_pre_header
    _
  $region3: #{meta_gru_forward.1} parent=0 // loop_header
    %s14 = sphi 0, %s18
    %p15 = scmp.ge.s32.totalorder %s14, 4
    %s21 = sphi 0, %s33
    %s22 = sphi 0, %s29
    %s23 = sphi 0, %s21
    %s24 = sphi 0, %s22
    %s25 = sphi 0, %s23
    %s26 = sphi 0, %s24
    %s38 = sphi 0, %s40
    %s41 = sphi 0, %s38
    %s42 = sphi 0, %s41
    %s58 = sphi 0, %s42
    %s64 = sphi 0, %s66
    %s67 = sphi 0, %s64
    %s68 = sphi 0, %s67
    %s84 = sphi 0, %s68
    %s90 = sphi 0, %s92
    %s93 = sphi 0, %s90
    %s94 = sphi 0, %s93
    %s110 = sphi 0, %s94
    %s116 = sphi 0, %s118
    %s119 = sphi 0, %s116
    %s120 = sphi 0, %s119
    %s136 = sphi 0, %s120
    %s142 = sphi 0, %s144
    %s145 = sphi 0, %s142
    %s146 = sphi 0, %s145
    %s162 = sphi 0, %s146
    %s168 = sphi 0, %s170
    %s171 = sphi 0, %s168
    %s172 = sphi 0, %s171
    %s188 = sphi 0, %s172
    %s194 = sphi 0, %s196
    %s197 = sphi 0, %s194
    %s198 = sphi 0, %s197
    %s214 = sphi 0, %s198
    %s220 = sphi 0, %s222
    %s223 = sphi 0, %s220
    %s224 = sphi 0, %s223
    %s240 = sphi 0, %s224
    %s248 = sphi 0, %s250
    %s251 = sphi 0, %s248
    %s252 = sphi 0, %s251
    %s268 = sphi 0, %s252
  $region4: #{meta_gru_forward.1} parent=0 // loop_header_branch
    %17 = sbr.rel (%p15) target = $region8
  $region5: #{meta_gru_forward.1} parent=0 // loop_body
    %s19 = ssub.s32 %s14, 1
    %s20 = ssub.s32 %s14, 2
    %s27 = sadd.s32 1, %s22
    %p28 = scmp.ge.s32.totalorder %s27, 1
    %s29 = scalar_select %p28, 0, %s27
    %s30 = sadd.s32 1, %s21
    %s31 = scalar_select %p28, %s30, %s21
    %p32 = scmp.ge.s32.totalorder %s31, 2
    %s33 = scalar_select %p32, 0, %s31
    %s34 = ssub.s32 %s21, %s33
    %s35 = ssub.s32 %s22, %s29
    %s36 = sor.u32 %s34, %s35
    %p37 = scmp.eq.s32.totalorder %s36, 0
    %s39 = sadd.s32 %s38, 1
    %s40 = scalar_select %p37, %s38, %s39
    %p43 = pneg %p37
    %p44 = scmp.eq.s32.totalorder %s14, 1
    %p45 = por %p43, %p44
    %p46 = scmp.ne.s32.totalorder %s38, %s41
    %p47 = scmp.eq.s32.totalorder %s14, 0
    %p48 = por %p46, %p47
    %p49 = scmp.ne.s32.totalorder %s38, %s41
    %p50 = scmp.eq.s32.totalorder %s19, 1
    %p51 = por %p49, %p50
    %p52 = scmp.ne.s32.totalorder %s41, %s42
    %p53 = scmp.eq.s32.totalorder %s19, 0
    %p54 = por %p52, %p53
    %p55 = scmp.ne.s32.totalorder %s41, %s42
    %p56 = scmp.eq.s32.totalorder %s20, 1
    %p57 = por %p55, %p56
    %p59 = scmp.ne.s32.totalorder %s42, %s58
    %p60 = scmp.eq.s32.totalorder %s20, 0
    %p61 = por %p59, %p60
    %s62 = ssub.s32 %s21, %s33
    %p63 = scmp.eq.s32.totalorder %s62, 0
    %s65 = sadd.s32 %s64, 1
    %s66 = scalar_select %p63, %s64, %s65
    %p69 = pneg %p63
    %p70 = scmp.eq.s32.totalorder %s14, 1
    %p71 = por %p69, %p70
    %p72 = scmp.ne.s32.totalorder %s64, %s67
    %p73 = scmp.eq.s32.totalorder %s14, 0
    %p74 = por %p72, %p73
    %p75 = scmp.ne.s32.totalorder %s64, %s67
    %p76 = scmp.eq.s32.totalorder %s19, 1
    %p77 = por %p75, %p76
    %p78 = scmp.ne.s32.totalorder %s67, %s68
    %p79 = scmp.eq.s32.totalorder %s19, 0
    %p80 = por %p78, %p79
    %p81 = scmp.ne.s32.totalorder %s67, %s68
    %p82 = scmp.eq.s32.totalorder %s20, 1
    %p83 = por %p81, %p82
    %p85 = scmp.ne.s32.totalorder %s68, %s84
    %p86 = scmp.eq.s32.totalorder %s20, 0
    %p87 = por %p85, %p86
    %s88 = ssub.s32 %s21, %s33
    %p89 = scmp.eq.s32.totalorder %s88, 0
    %s91 = sadd.s32 %s90, 1
    %s92 = scalar_select %p89, %s90, %s91
    %p95 = pneg %p89
    %p96 = scmp.eq.s32.totalorder %s14, 1
    %p97 = por %p95, %p96
    %p98 = scmp.ne.s32.totalorder %s90, %s93
    %p99 = scmp.eq.s32.totalorder %s14, 0
    %p100 = por %p98, %p99
    %p101 = scmp.ne.s32.totalorder %s90, %s93
    %p102 = scmp.eq.s32.totalorder %s19, 1
    %p103 = por %p101, %p102
    %p104 = scmp.ne.s32.totalorder %s93, %s94
    %p105 = scmp.eq.s32.totalorder %s19, 0
    %p106 = por %p104, %p105
    %p107 = scmp.ne.s32.totalorder %s93, %s94
    %p108 = scmp.eq.s32.totalorder %s20, 1
    %p109 = por %p107, %p108
    %p111 = scmp.ne.s32.totalorder %s94, %s110
    %p112 = scmp.eq.s32.totalorder %s20, 0
    %p113 = por %p111, %p112
    %s114 = ssub.s32 %s21, %s33
    %p115 = scmp.eq.s32.totalorder %s114, 0
    %s117 = sadd.s32 %s116, 1
    %s118 = scalar_select %p115, %s116, %s117
    %p121 = pneg %p115
    %p122 = scmp.eq.s32.totalorder %s14, 1
    %p123 = por %p121, %p122
    %p124 = scmp.ne.s32.totalorder %s116, %s119
    %p125 = scmp.eq.s32.totalorder %s14, 0
    %p126 = por %p124, %p125
    %p127 = scmp.ne.s32.totalorder %s116, %s119
    %p128 = scmp.eq.s32.totalorder %s19, 1
    %p129 = por %p127, %p128
    %p130 = scmp.ne.s32.totalorder %s119, %s120
    %p131 = scmp.eq.s32.totalorder %s19, 0
    %p132 = por %p130, %p131
    %p133 = scmp.ne.s32.totalorder %s119, %s120
    %p134 = scmp.eq.s32.totalorder %s20, 1
    %p135 = por %p133, %p134
    %p137 = scmp.ne.s32.totalorder %s120, %s136
    %p138 = scmp.eq.s32.totalorder %s20, 0
    %p139 = por %p137, %p138
    %s140 = ssub.s32 %s21, %s33
    %p141 = scmp.eq.s32.totalorder %s140, 0
    %s143 = sadd.s32 %s142, 1
    %s144 = scalar_select %p141, %s142, %s143
    %p147 = pneg %p141
    %p148 = scmp.eq.s32.totalorder %s14, 1
    %p149 = por %p147, %p148
    %p150 = scmp.ne.s32.totalorder %s142, %s145
    %p151 = scmp.eq.s32.totalorder %s14, 0
    %p152 = por %p150, %p151
    %p153 = scmp.ne.s32.totalorder %s142, %s145
    %p154 = scmp.eq.s32.totalorder %s19, 1
    %p155 = por %p153, %p154
    %p156 = scmp.ne.s32.totalorder %s145, %s146
    %p157 = scmp.eq.s32.totalorder %s19, 0
    %p158 = por %p156, %p157
    %p159 = scmp.ne.s32.totalorder %s145, %s146
    %p160 = scmp.eq.s32.totalorder %s20, 1
    %p161 = por %p159, %p160
    %p163 = scmp.ne.s32.totalorder %s146, %s162
    %p164 = scmp.eq.s32.totalorder %s20, 0
    %p165 = por %p163, %p164
    %s166 = ssub.s32 %s21, %s33
    %p167 = scmp.eq.s32.totalorder %s166, 0
    %s169 = sadd.s32 %s168, 1
    %s170 = scalar_select %p167, %s168, %s169
    %p173 = pneg %p167
    %p174 = scmp.eq.s32.totalorder %s14, 1
    %p175 = por %p173, %p174
    %p176 = scmp.ne.s32.totalorder %s168, %s171
    %p177 = scmp.eq.s32.totalorder %s14, 0
    %p178 = por %p176, %p177
    %p179 = scmp.ne.s32.totalorder %s168, %s171
    %p180 = scmp.eq.s32.totalorder %s19, 1
    %p181 = por %p179, %p180
    %p182 = scmp.ne.s32.totalorder %s171, %s172
    %p183 = scmp.eq.s32.totalorder %s19, 0
    %p184 = por %p182, %p183
    %p185 = scmp.ne.s32.totalorder %s171, %s172
    %p186 = scmp.eq.s32.totalorder %s20, 1
    %p187 = por %p185, %p186
    %p189 = scmp.ne.s32.totalorder %s172, %s188
    %p190 = scmp.eq.s32.totalorder %s20, 0
    %p191 = por %p189, %p190
    %s192 = ssub.s32 %s21, %s33
    %p193 = scmp.eq.s32.totalorder %s192, 0
    %s195 = sadd.s32 %s194, 1
    %s196 = scalar_select %p193, %s194, %s195
    %p199 = pneg %p193
    %p200 = scmp.eq.s32.totalorder %s14, 1
    %p201 = por %p199, %p200
    %p202 = scmp.ne.s32.totalorder %s194, %s197
    %p203 = scmp.eq.s32.totalorder %s14, 0
    %p204 = por %p202, %p203
    %p205 = scmp.ne.s32.totalorder %s194, %s197
    %p206 = scmp.eq.s32.totalorder %s19, 1
    %p207 = por %p205, %p206
    %p208 = scmp.ne.s32.totalorder %s197, %s198
    %p209 = scmp.eq.s32.totalorder %s19, 0
    %p210 = por %p208, %p209
    %p211 = scmp.ne.s32.totalorder %s197, %s198
    %p212 = scmp.eq.s32.totalorder %s20, 1
    %p213 = por %p211, %p212
    %p215 = scmp.ne.s32.totalorder %s198, %s214
    %p216 = scmp.eq.s32.totalorder %s20, 0
    %p217 = por %p215, %p216
    %s218 = ssub.s32 %s21, %s33
    %p219 = scmp.eq.s32.totalorder %s218, 0
    %s221 = sadd.s32 %s220, 1
    %s222 = scalar_select %p219, %s220, %s221
    %p225 = pneg %p219
    %p226 = scmp.eq.s32.totalorder %s14, 1
    %p227 = por %p225, %p226
    %p228 = scmp.ne.s32.totalorder %s220, %s223
    %p229 = scmp.eq.s32.totalorder %s14, 0
    %p230 = por %p228, %p229
    %p231 = scmp.ne.s32.totalorder %s220, %s223
    %p232 = scmp.eq.s32.totalorder %s19, 1
    %p233 = por %p231, %p232
    %p234 = scmp.ne.s32.totalorder %s223, %s224
    %p235 = scmp.eq.s32.totalorder %s19, 0
    %p236 = por %p234, %p235
    %p237 = scmp.ne.s32.totalorder %s223, %s224
    %p238 = scmp.eq.s32.totalorder %s20, 1
    %p239 = por %p237, %p238
    %p241 = scmp.ne.s32.totalorder %s224, %s240
    %p242 = scmp.eq.s32.totalorder %s20, 0
    %p243 = por %p241, %p242
    %s244 = ssub.s32 %s21, %s33
    %s245 = ssub.s32 %s22, %s29
    %s246 = sor.u32 %s244, %s245
    %p247 = scmp.eq.s32.totalorder %s246, 0
    %s249 = sadd.s32 %s248, 1
    %s250 = scalar_select %p247, %s248, %s249
    %p253 = pneg %p247
    %p254 = scmp.eq.s32.totalorder %s14, 1
    %p255 = por %p253, %p254
    %p256 = scmp.ne.s32.totalorder %s248, %s251
    %p257 = scmp.eq.s32.totalorder %s14, 0
    %p258 = por %p256, %p257
    %p259 = scmp.ne.s32.totalorder %s248, %s251
    %p260 = scmp.eq.s32.totalorder %s19, 1
    %p261 = por %p259, %p260
    %p262 = scmp.ne.s32.totalorder %s251, %s252
    %p263 = scmp.eq.s32.totalorder %s19, 0
    %p264 = por %p262, %p263
    %p265 = scmp.ne.s32.totalorder %s251, %s252
    %p266 = scmp.eq.s32.totalorder %s20, 1
    %p267 = por %p265, %p266
    %p269 = scmp.ne.s32.totalorder %s252, %s268
    %p270 = scmp.eq.s32.totalorder %s20, 0
    %p271 = por %p269, %p270
    %p272 = scmp.le.s32.totalorder 1, %s14
    %p273 = scmp.lt.s32.totalorder %s14, 3
    %p274 = pnand %p272, %p273
    %p275 = pneg %p274
    // Predicated region
    $region9: #{meta_gru_forward.1} parent=5 // pred_check
      _
    $region10: #{meta_gru_forward.1} parent=5 // pred_check_branch
      %277 = sbr.rel (%p274) target = $region12
    $region11: #{meta_gru_forward.1} parent=5 // pred_region
      %s278 = ssub.s32 %s14, 1
    $region12: #{meta_gru_forward.1} parent=5 // pred_fallthru
      _
    %p279 = scmp.lt.s32.totalorder %s14, 2
    // Predicated region
    $region13: #{meta_gru_forward.1} parent=5 // pred_check
      %p280 = pneg %p279
    $region14: #{meta_gru_forward.1} parent=5 // pred_check_branch
      %282 = sbr.rel (%p280) target = $region16
    $region15: #{meta_gru_forward.1} parent=5 // pred_region
      // Predicated region
      $region17: #{meta_gru_forward.1} parent=15 // pred_check
        %p283 = pneg %p48
      $region18: #{meta_gru_forward.1} parent=15 // pred_check_branch
        %285 = sbr.rel (%p283) target = $region20
      $region19: #{meta_gru_forward.1} parent=15 // pred_region
        %p286 = scmp.lt.s32.totalorder %s21, 1
        %s287 = scalar_select %p286, %s21, 1
        %p288 = scmp.lt.s32.totalorder %s22, 0
        %s289 = scalar_select %p288, %s22, 0
        %s290 = sadd.s32 %s289, %s287
        %s291 = smul.addr %s290, 8
        %s292 = scalar_lea.vmem %s0, %s291
      $region20: #{meta_gru_forward.1} parent=15 // pred_fallthru
        _
      // Predicated region
      $region21: #{meta_gru_forward.1} parent=15 // pred_check
        %p293 = pneg %p74
      $region22: #{meta_gru_forward.1} parent=15 // pred_check_branch
        %295 = sbr.rel (%p293) target = $region24
      $region23: #{meta_gru_forward.1} parent=15 // pred_region
        %p296 = scmp.lt.s32.totalorder %s21, 1
        %s297 = scalar_select %p296, %s21, 1
        %s298 = smul.addr %s297, 16
        %s299 = smul.addr %s298, 4
        %s300 = scalar_lea.vmem %s1, %s299
      $region24: #{meta_gru_forward.1} parent=15 // pred_fallthru
        _
      // Predicated region
      $region25: #{meta_gru_forward.1} parent=15 // pred_check
        %p301 = pneg %p100
      $region26: #{meta_gru_forward.1} parent=15 // pred_check_branch
        %303 = sbr.rel (%p301) target = $region28
      $region27: #{meta_gru_forward.1} parent=15 // pred_region
        %p304 = scmp.lt.s32.totalorder %s21, 1
        %s305 = scalar_select %p304, %s21, 1
        %s306 = scalar_lea.vmem %s2, %s305
      $region28: #{meta_gru_forward.1} parent=15 // pred_fallthru
        _
      // Predicated region
      $region29: #{meta_gru_forward.1} parent=15 // pred_check
        %p307 = pneg %p126
      $region30: #{meta_gru_forward.1} parent=15 // pred_check_branch
        %309 = sbr.rel (%p307) target = $region32
      $region31: #{meta_gru_forward.1} parent=15 // pred_region
        %p310 = scmp.lt.s32.totalorder %s21, 1
        %s311 = scalar_select %p310, %s21, 1
        %s312 = smul.addr %s311, 16
        %s313 = smul.addr %s312, 4
        %s314 = scalar_lea.vmem %s3, %s313
      $region32: #{meta_gru_forward.1} parent=15 // pred_fallthru
        _
      // Predicated region
      $region33: #{meta_gru_forward.1} parent=15 // pred_check
        %p315 = pneg %p152
      $region34: #{meta_gru_forward.1} parent=15 // pred_check_branch
        %317 = sbr.rel (%p315) target = $region36
      $region35: #{meta_gru_forward.1} parent=15 // pred_region
        %p318 = scmp.lt.s32.totalorder %s21, 1
        %s319 = scalar_select %p318, %s21, 1
        %s320 = smul.addr %s319, 16
        %s321 = smul.addr %s320, 4
        %s322 = scalar_lea.vmem %s4, %s321
      $region36: #{meta_gru_forward.1} parent=15 // pred_fallthru
        _
      // Predicated region
      $region37: #{meta_gru_forward.1} parent=15 // pred_check
        %p323 = pneg %p178
      $region38: #{meta_gru_forward.1} parent=15 // pred_check_branch
        %325 = sbr.rel (%p323) target = $region40
      $region39: #{meta_gru_forward.1} parent=15 // pred_region
        %p326 = scmp.lt.s32.totalorder %s21, 1
        %s327 = scalar_select %p326, %s21, 1
        %s328 = scalar_lea.vmem %s5, %s327
      $region40: #{meta_gru_forward.1} parent=15 // pred_fallthru
        _
      // Predicated region
      $region41: #{meta_gru_forward.1} parent=15 // pred_check
        %p329 = pneg %p204
      $region42: #{meta_gru_forward.1} parent=15 // pred_check_branch
        %331 = sbr.rel (%p329) target = $region44
      $region43: #{meta_gru_forward.1} parent=15 // pred_region
        %p332 = scmp.lt.s32.totalorder %s21, 1
        %s333 = scalar_select %p332, %s21, 1
        %s334 = scalar_lea.vmem %s6, %s333
      $region44: #{meta_gru_forward.1} parent=15 // pred_fallthru
        _
      // Predicated region
      $region45: #{meta_gru_forward.1} parent=15 // pred_check
        %p335 = pneg %p230
      $region46: #{meta_gru_forward.1} parent=15 // pred_check_branch
        %337 = sbr.rel (%p335) target = $region48
      $region47: #{meta_gru_forward.1} parent=15 // pred_region
        %p338 = scmp.lt.s32.totalorder %s21, 1
        %s339 = scalar_select %p338, %s21, 1
        %s340 = scalar_lea.vmem %s7, %s339
      $region48: #{meta_gru_forward.1} parent=15 // pred_fallthru
        _
    $region16: #{meta_gru_forward.1} parent=5 // pred_fallthru
      _
    %p341 = scmp.le.s32.totalorder 1, %s14
    %p342 = scmp.lt.s32.totalorder %s14, 3
    %p343 = pnand %p341, %p342
    %p344 = pneg %p343
    // Predicated region
    $region49: #{meta_gru_forward.1} parent=5 // pred_check
      _
    $region50: #{meta_gru_forward.1} parent=5 // pred_check_branch
      %346 = sbr.rel (%p343) target = $region52
    $region51: #{meta_gru_forward.1} parent=5 // pred_region
      %s347 = ssub.s32 %s14, 1
      %p348 = scmp.lt.s32.totalorder %s23, 1
      %s349 = scalar_select %p348, %s23, 1
      %p350 = scmp.lt.s32.totalorder %s24, 0
      %s351 = scalar_select %p350, %s24, 0
      %s352 = sadd.s32 %s351, %s349
      %s353 = smul.addr %s352, 8
      %s354 = scalar_lea.vmem %s0, %s353
      %p355 = pneg %p54
      %p356 = pneg %p51
      %p357 = scmp.lt.s32.totalorder %s23, 1
      %s358 = scalar_select %p357, %s23, 1
      %s359 = smul.addr %s358, 16
      %s360 = smul.addr %s359, 4
      %s361 = scalar_lea.vmem %s1, %s360
      %p362 = pneg %p80
      %p363 = pneg %p77
      %p364 = scmp.lt.s32.totalorder %s23, 1
      %s365 = scalar_select %p364, %s23, 1
      %s366 = scalar_lea.vmem %s2, %s365
      %p367 = pneg %p106
      %p368 = pneg %p103
      %p369 = scmp.lt.s32.totalorder %s23, 1
      %s370 = scalar_select %p369, %s23, 1
      %s371 = smul.addr %s370, 16
      %s372 = smul.addr %s371, 4
      %s373 = scalar_lea.vmem %s3, %s372
      %p374 = pneg %p132
      %p375 = pneg %p129
      %p376 = scmp.lt.s32.totalorder %s23, 1
      %s377 = scalar_select %p376, %s23, 1
      %s378 = smul.addr %s377, 16
      %s379 = smul.addr %s378, 4
      %s380 = scalar_lea.vmem %s4, %s379
      %p381 = pneg %p158
      %p382 = pneg %p155
      %p383 = scmp.lt.s32.totalorder %s23, 1
      %s384 = scalar_select %p383, %s23, 1
      %s385 = scalar_lea.vmem %s5, %s384
      %p386 = pneg %p184
      %p387 = pneg %p181
      %p388 = scmp.lt.s32.totalorder %s23, 1
      %s389 = scalar_select %p388, %s23, 1
      %s390 = scalar_lea.vmem %s6, %s389
      %p391 = pneg %p210
      %p392 = pneg %p207
      %p393 = scmp.lt.s32.totalorder %s23, 1
      %s394 = scalar_select %p393, %s23, 1
      %s395 = scalar_lea.vmem %s7, %s394
      %p396 = pneg %p236
      %p397 = pneg %p233
      %p398 = pneg %p264
      %p399 = pneg %p261
      %p400 = scmp.lt.s32.totalorder %s23, 1
      %s401 = scalar_select %p400, %s23, 1
      %p402 = scmp.lt.s32.totalorder %s24, 0
      %s403 = scalar_select %p402, %s24, 0
      %s404 = smul.addr %s403, 4
      %s405 = smul.addr %s401, 4
      %s406 = sadd.s32 %s404, %s405
      %s407 = smul.addr %s406, 8
      %s408 = scalar_lea.vmem %s8, %s407
      %p409 = scmp.lt.s32.totalorder %s23, 1
      %s410 = scalar_select %p409, %s23, 1
      %p411 = scmp.lt.s32.totalorder %s24, 0
      %s412 = scalar_select %p411, %s24, 0
      %s413 = sadd.s32 %s412, %s410
      %s414 = smul.addr %s413, 8
      %s415 = scalar_lea.vmem %s0, %s414
      %p416 = scmp.lt.s32.totalorder %s23, 1
      %s417 = scalar_select %p416, %s23, 1
      %s418 = smul.addr %s417, 16
      %s419 = smul.addr %s418, 4
      %s420 = scalar_lea.vmem %s1, %s419
      %p421 = scmp.lt.s32.totalorder %s23, 1
      %s422 = scalar_select %p421, %s23, 1
      %s423 = scalar_lea.vmem %s2, %s422
      %p424 = scmp.lt.s32.totalorder %s23, 1
      %s425 = scalar_select %p424, %s23, 1
      %s426 = smul.addr %s425, 16
      %s427 = smul.addr %s426, 4
      %s428 = scalar_lea.vmem %s3, %s427
      %p429 = scmp.lt.s32.totalorder %s23, 1
      %s430 = scalar_select %p429, %s23, 1
      %s431 = smul.addr %s430, 16
      %s432 = smul.addr %s431, 4
      %s433 = scalar_lea.vmem %s4, %s432
      %p434 = scmp.lt.s32.totalorder %s23, 1
      %s435 = scalar_select %p434, %s23, 1
      %s436 = scalar_lea.vmem %s5, %s435
      %p437 = scmp.lt.s32.totalorder %s23, 1
      %s438 = scalar_select %p437, %s23, 1
      %s439 = scalar_lea.vmem %s6, %s438
      %p440 = scmp.lt.s32.totalorder %s23, 1
      %s441 = scalar_select %p440, %s23, 1
      %s442 = scalar_lea.vmem %s7, %s441
      %p443 = scmp.lt.s32.totalorder %s23, 1
      %s444 = scalar_select %p443, %s23, 1
      %p445 = scmp.lt.s32.totalorder %s24, 0
      %s446 = scalar_select %p445, %s24, 0
      %s447 = smul.addr %s446, 4
      %s448 = smul.addr %s444, 4
      %s449 = sadd.s32 %s447, %s448
      %s450 = smul.addr %s449, 8
      %s451 = scalar_lea.vmem %s8, %s450
      %v453 = vld [vmem:[%s415] sm:$0xff]
      %454 = vst [vmem:[%s451] sm:$0xff] %v453
      %v455 = vld [vmem:[%s423] sm:$0x1]
      %v457 = vlaneseq
      %v458 = vshrl.u32 %v457, 7
      %v459 = vsub.s32 0, %v458
      %v460 = vrot.slane %v455, %v459
      %v462 = vld [vmem:[%s436] sm:$0x1]
      %v464 = vlaneseq
      %v465 = vshrl.u32 %v464, 7
      %v466 = vsub.s32 0, %v465
      %v467 = vrot.slane %v462, %v466
      %v469 = vld [vmem:[%s439] sm:$0x1]
      %v471 = vlaneseq
      %v472 = vshrl.u32 %v471, 7
      %v473 = vsub.s32 0, %v472
      %v474 = vrot.slane %v469, %v473
      %v476 = vld [vmem:[%s442] sm:$0x1]
      %v478 = vlaneseq
      %v479 = vshrl.u32 %v478, 7
      %v480 = vsub.s32 0, %v479
      %v481 = vrot.slane %v476, %v480
      %v483 = vld [vmem:[%s420] sm:$0xf]
      %v484 = vld [vmem:[%s420 + $0x4] sm:$0xf]
      %v485 = vld [vmem:[%s420 + $0x8] sm:$0xf]
      %v486 = vld [vmem:[%s420 + $0xc] sm:$0xf]
      %v487 = vld [vmem:[%s420 + $0x10] sm:$0xf]
      %v488 = vld [vmem:[%s420 + $0x14] sm:$0xf]
      %v489 = vld [vmem:[%s420 + $0x18] sm:$0xf]
      %v490 = vld [vmem:[%s420 + $0x1c] sm:$0xf]
      %v491 = vld [vmem:[%s420 + $0x20] sm:$0xf]
      %v492 = vld [vmem:[%s420 + $0x24] sm:$0xf]
      %v493 = vld [vmem:[%s420 + $0x28] sm:$0xf]
      %v494 = vld [vmem:[%s420 + $0x2c] sm:$0xf]
      %v495 = vld [vmem:[%s420 + $0x30] sm:$0xf]
      %v496 = vld [vmem:[%s420 + $0x34] sm:$0xf]
      %v497 = vld [vmem:[%s420 + $0x38] sm:$0xf]
      %v498 = vld [vmem:[%s420 + $0x3c] sm:$0xf]
      %v499 = vld [vmem:[%s428] sm:$0xf]
      %v500 = vld [vmem:[%s428 + $0x4] sm:$0xf]
      %v501 = vld [vmem:[%s428 + $0x8] sm:$0xf]
      %v502 = vld [vmem:[%s428 + $0xc] sm:$0xf]
      %v503 = vld [vmem:[%s428 + $0x10] sm:$0xf]
      %v504 = vld [vmem:[%s428 + $0x14] sm:$0xf]
      %v505 = vld [vmem:[%s428 + $0x18] sm:$0xf]
      %v506 = vld [vmem:[%s428 + $0x1c] sm:$0xf]
      %v507 = vld [vmem:[%s428 + $0x20] sm:$0xf]
      %v508 = vld [vmem:[%s428 + $0x24] sm:$0xf]
      %v509 = vld [vmem:[%s428 + $0x28] sm:$0xf]
      %v510 = vld [vmem:[%s428 + $0x2c] sm:$0xf]
      %v511 = vld [vmem:[%s428 + $0x30] sm:$0xf]
      %v512 = vld [vmem:[%s428 + $0x34] sm:$0xf]
      %v513 = vld [vmem:[%s428 + $0x38] sm:$0xf]
      %v514 = vld [vmem:[%s428 + $0x3c] sm:$0xf]
      %v515 = vld [vmem:[%s433] sm:$0xf]
      %v516 = vld [vmem:[%s433 + $0x4] sm:$0xf]
      %v517 = vld [vmem:[%s433 + $0x8] sm:$0xf]
      %v518 = vld [vmem:[%s433 + $0xc] sm:$0xf]
      %v519 = vld [vmem:[%s433 + $0x10] sm:$0xf]
      %v520 = vld [vmem:[%s433 + $0x14] sm:$0xf]
      %v521 = vld [vmem:[%s433 + $0x18] sm:$0xf]
      %v522 = vld [vmem:[%s433 + $0x1c] sm:$0xf]
      %v523 = vld [vmem:[%s433 + $0x20] sm:$0xf]
      %v524 = vld [vmem:[%s433 + $0x24] sm:$0xf]
      %v525 = vld [vmem:[%s433 + $0x28] sm:$0xf]
      %v526 = vld [vmem:[%s433 + $0x2c] sm:$0xf]
      %v527 = vld [vmem:[%s433 + $0x30] sm:$0xf]
      %v528 = vld [vmem:[%s433 + $0x34] sm:$0xf]
      %v529 = vld [vmem:[%s433 + $0x38] sm:$0xf]
      %v530 = vld [vmem:[%s433 + $0x3c] sm:$0xf]
      %v531 = vpack.c.bf16 %v453, %v453
      %v548 = vunpack.c.l.b16 %v483
      %v549 = vunpack.c.l.b16 %v484
      %v550 = vunpack.c.l.b16 %v485
      %v551 = vunpack.c.l.b16 %v486
      %v552 = vunpack.c.l.b16 %v487
      %v553 = vunpack.c.l.b16 %v488
      %v554 = vunpack.c.l.b16 %v489
      %v555 = vunpack.c.l.b16 %v490
      %v556 = vunpack.c.l.b16 %v491
      %v557 = vunpack.c.l.b16 %v492
      %v558 = vunpack.c.l.b16 %v493
      %v559 = vunpack.c.l.b16 %v494
      %v560 = vunpack.c.l.b16 %v495
      %v561 = vunpack.c.l.b16 %v496
      %v562 = vunpack.c.l.b16 %v497
      %v563 = vunpack.c.l.b16 %v498
      %v564 = vpack.c.b16 %v549, %v548
      %v565 = vpack.c.b16 %v551, %v550
      %v566 = vpack.c.b16 %v553, %v552
      %v567 = vpack.c.b16 %v555, %v554
      %v568 = vpack.c.b16 %v557, %v556
      %v569 = vpack.c.b16 %v559, %v558
      %v570 = vpack.c.b16 %v561, %v560
      %v571 = vpack.c.b16 %v563, %v562
      %580 = vmatprep.subr.bf16.mxu0 0
      %581 = vmatpush1.bf16.msra.mxu0 %v571
      %582 = vmatprep.subr.bf16.mxu0 0
      %583 = vmatpush1.bf16.msra.mxu0 %v570
      %584 = vmatprep.subr.bf16.mxu0 0
      %585 = vmatpush1.bf16.msra.mxu0 %v569
      %586 = vmatprep.subr.bf16.mxu0 0
      %587 = vmatpush1.bf16.msra.mxu0 %v568
      %588 = vmatprep.subr.bf16.mxu0 0
      %589 = vmatpush1.bf16.msra.mxu0 %v567
      %590 = vmatprep.subr.bf16.mxu0 0
      %591 = vmatpush1.bf16.msra.mxu0 %v566
      %592 = vmatprep.subr.bf16.mxu0 0
      %593 = vmatpush1.bf16.msra.mxu0 %v565
      %594 = vmatprep.subr.bf16.mxu0 0
      %595 = vmatpush1.bf16.msra.mxu0 %v564
      %596 = vmatprep.subr.bf16.mxu0 0
      %597 = vmatpush2.bf16.msra.mxu0 0
      %598 = vmatprep.subr.bf16.mxu0 0
      %599 = vmatpush2.bf16.msra.mxu0 0
      %600 = vmatprep.subr.bf16.mxu0 0
      %601 = vmatpush2.bf16.msra.mxu0 0
      %602 = vmatprep.subr.bf16.mxu0 0
      %603 = vmatpush2.bf16.msra.mxu0 0
      %604 = vmatprep.subr.bf16.mxu0 0
      %605 = vmatpush2.bf16.msra.mxu0 0
      %606 = vmatprep.subr.bf16.mxu0 0
      %607 = vmatpush2.bf16.msra.mxu0 0
      %608 = vmatprep.subr.bf16.mxu0 0
      %609 = vmatpush2.bf16.msra.mxu0 0
      %610 = vmatprep.subr.bf16.mxu0 0
      %611 = vmatpush2.bf16.msra.mxu0 0
      %612 = vmatprep.mubr.bf16.mxu0 0
      %613 = vmatmul.mubr.bf16.gmra.mxu0 %v531
      %v614 = vpop.f32.mrf.mxu0
      %v615 = vadd.f32 %v460, %v614
      %v616 = vpop.f32.mrf.mxu0
      %v617 = vpop.f32.mrf.mxu0
      %v618 = vpop.f32.mrf.mxu0
      %619 = vdwg.mxu0
      %v620 = vtanh.pop %v615
      %v621 = vpack.c.bf16 %v620, %v620
      %v638 = vunpack.c.l.b16 %v499
      %v639 = vunpack.c.l.b16 %v500
      %v640 = vunpack.c.l.b16 %v501
      %v641 = vunpack.c.l.b16 %v502
      %v642 = vunpack.c.l.b16 %v503
      %v643 = vunpack.c.l.b16 %v504
      %v644 = vunpack.c.l.b16 %v505
      %v645 = vunpack.c.l.b16 %v506
      %v646 = vunpack.c.l.b16 %v507
      %v647 = vunpack.c.l.b16 %v508
      %v648 = vunpack.c.l.b16 %v509
      %v649 = vunpack.c.l.b16 %v510
      %v650 = vunpack.c.l.b16 %v511
      %v651 = vunpack.c.l.b16 %v512
      %v652 = vunpack.c.l.b16 %v513
      %v653 = vunpack.c.l.b16 %v514
      %v654 = vpack.c.b16 %v639, %v638
      %v655 = vpack.c.b16 %v641, %v640
      %v656 = vpack.c.b16 %v643, %v642
      %v657 = vpack.c.b16 %v645, %v644
      %v658 = vpack.c.b16 %v647, %v646
      %v659 = vpack.c.b16 %v649, %v648
      %v660 = vpack.c.b16 %v651, %v650
      %v661 = vpack.c.b16 %v653, %v652
      %670 = vmatprep.subr.bf16.mxu0 0
      %671 = vmatpush1.bf16.msra.mxu0 %v661
      %672 = vmatprep.subr.bf16.mxu0 0
      %673 = vmatpush1.bf16.msra.mxu0 %v660
      %674 = vmatprep.subr.bf16.mxu0 0
      %675 = vmatpush1.bf16.msra.mxu0 %v659
      %676 = vmatprep.subr.bf16.mxu0 0
      %677 = vmatpush1.bf16.msra.mxu0 %v658
      %678 = vmatprep.subr.bf16.mxu0 0
      %679 = vmatpush1.bf16.msra.mxu0 %v657
      %680 = vmatprep.subr.bf16.mxu0 0
      %681 = vmatpush1.bf16.msra.mxu0 %v656
      %682 = vmatprep.subr.bf16.mxu0 0
      %683 = vmatpush1.bf16.msra.mxu0 %v655
      %684 = vmatprep.subr.bf16.mxu0 0
      %685 = vmatpush1.bf16.msra.mxu0 %v654
      %686 = vmatprep.subr.bf16.mxu0 0
      %687 = vmatpush2.bf16.msra.mxu0 0
      %688 = vmatprep.subr.bf16.mxu0 0
      %689 = vmatpush2.bf16.msra.mxu0 0
      %690 = vmatprep.subr.bf16.mxu0 0
      %691 = vmatpush2.bf16.msra.mxu0 0
      %692 = vmatprep.subr.bf16.mxu0 0
      %693 = vmatpush2.bf16.msra.mxu0 0
      %694 = vmatprep.subr.bf16.mxu0 0
      %695 = vmatpush2.bf16.msra.mxu0 0
      %696 = vmatprep.subr.bf16.mxu0 0
      %697 = vmatpush2.bf16.msra.mxu0 0
      %698 = vmatprep.subr.bf16.mxu0 0
      %699 = vmatpush2.bf16.msra.mxu0 0
      %700 = vmatprep.subr.bf16.mxu0 0
      %701 = vmatpush2.bf16.msra.mxu0 0
      %702 = vmatprep.mubr.bf16.mxu0 0
      %703 = vmatmul.mubr.bf16.gmra.mxu0 %v621
      %v704 = vpop.f32.mrf.mxu0
      %v705 = vadd.f32 0.0, %v704
      %v706 = vpop.f32.mrf.mxu0
      %v707 = vpop.f32.mrf.mxu0
      %v708 = vpop.f32.mrf.mxu0
      %709 = vdwg.mxu0
      %v726 = vunpack.c.l.b16 %v515
      %v727 = vunpack.c.l.b16 %v516
      %v728 = vunpack.c.l.b16 %v517
      %v729 = vunpack.c.l.b16 %v518
      %v730 = vunpack.c.l.b16 %v519
      %v731 = vunpack.c.l.b16 %v520
      %v732 = vunpack.c.l.b16 %v521
      %v733 = vunpack.c.l.b16 %v522
      %v734 = vunpack.c.l.b16 %v523
      %v735 = vunpack.c.l.b16 %v524
      %v736 = vunpack.c.l.b16 %v525
      %v737 = vunpack.c.l.b16 %v526
      %v738 = vunpack.c.l.b16 %v527
      %v739 = vunpack.c.l.b16 %v528
      %v740 = vunpack.c.l.b16 %v529
      %v741 = vunpack.c.l.b16 %v530
      %v742 = vpack.c.b16 %v727, %v726
      %v743 = vpack.c.b16 %v729, %v728
      %v744 = vpack.c.b16 %v731, %v730
      %v745 = vpack.c.b16 %v733, %v732
      %v746 = vpack.c.b16 %v735, %v734
      %v747 = vpack.c.b16 %v737, %v736
      %v748 = vpack.c.b16 %v739, %v738
      %v749 = vpack.c.b16 %v741, %v740
      %758 = vmatprep.subr.bf16.mxu0 0
      %759 = vmatpush1.bf16.msra.mxu0 %v749
      %760 = vmatprep.subr.bf16.mxu0 0
      %761 = vmatpush1.bf16.msra.mxu0 %v748
      %762 = vmatprep.subr.bf16.mxu0 0
      %763 = vmatpush1.bf16.msra.mxu0 %v747
      %764 = vmatprep.subr.bf16.mxu0 0
      %765 = vmatpush1.bf16.msra.mxu0 %v746
      %766 = vmatprep.subr.bf16.mxu0 0
      %767 = vmatpush1.bf16.msra.mxu0 %v745
      %768 = vmatprep.subr.bf16.mxu0 0
      %769 = vmatpush1.bf16.msra.mxu0 %v744
      %770 = vmatprep.subr.bf16.mxu0 0
      %771 = vmatpush1.bf16.msra.mxu0 %v743
      %772 = vmatprep.subr.bf16.mxu0 0
      %773 = vmatpush1.bf16.msra.mxu0 %v742
      %774 = vmatprep.subr.bf16.mxu0 0
      %775 = vmatpush2.bf16.msra.mxu0 0
      %776 = vmatprep.subr.bf16.mxu0 0
      %777 = vmatpush2.bf16.msra.mxu0 0
      %778 = vmatprep.subr.bf16.mxu0 0
      %779 = vmatpush2.bf16.msra.mxu0 0
      %780 = vmatprep.subr.bf16.mxu0 0
      %781 = vmatpush2.bf16.msra.mxu0 0
      %782 = vmatprep.subr.bf16.mxu0 0
      %783 = vmatpush2.bf16.msra.mxu0 0
      %784 = vmatprep.subr.bf16.mxu0 0
      %785 = vmatpush2.bf16.msra.mxu0 0
      %786 = vmatprep.subr.bf16.mxu0 0
      %787 = vmatpush2.bf16.msra.mxu0 0
      %788 = vmatprep.subr.bf16.mxu0 0
      %789 = vmatpush2.bf16.msra.mxu0 0
      %790 = vmatprep.mubr.bf16.mxu0 0
      %791 = vmatmul.mubr.bf16.gmra.mxu0 %v531
      %v792 = vpop.f32.mrf.mxu0
      %v793 = vadd.f32 0.0, %v792
      %v794 = vpop.f32.mrf.mxu0
      %v795 = vpop.f32.mrf.mxu0
      %v796 = vpop.f32.mrf.mxu0
      %797 = vdwg.mxu0
      %v798 = vadd.f32 %v705, %v793
      %v799 = vadd.f32 %v798, %v467
      %v800 = vxor.u32 %v799, 2147483648
      %v801 = vmul.f32 %v800, 1.442695
      %v802 = vpow.pop %v801
      %v803 = vadd.f32 %v802, 1.0
      %v804 = vrcp.pop %v803
      %v805 = vmul.f32 1.0, %v804
      %806 = vrot.lane.b32.xlu0 %v805, 64
      %v807 = vpop.permute.xlu0 %806
      %v808 = vadd.f32 %v705, %v474
      %v809 = vadd.f32 %v793, %v481
      %v810 = vmul.f32 %v807, %v809
      %v811 = vadd.f32 %v808, %v810
      %v812 = vtanh.pop %v811
      %813 = vrot.lane.b32.xlu0 %v812, 64
      %v814 = vpop.permute.xlu0 %813
      %815 = vrot.lane.b32.xlu0 %v805, 96
      %v816 = vpop.permute.xlu0 %815
      %v817 = vsub.f32 1.0, %v816
      %v818 = vmul.f32 %v817, %v814
      %v819 = vmul.f32 %v816, %v453
      %v820 = vadd.f32 %v818, %v819
      %821 = vst [vmem:[%s451 + $0x8] sm:$0xff] %v820
      %v822 = vpack.c.bf16 %v820, %v820
      %823 = vmatprep.subr.bf16.mxu0 0
      %824 = vmatpush1.bf16.msra.mxu0 %v571
      %825 = vmatprep.subr.bf16.mxu0 0
      %826 = vmatpush1.bf16.msra.mxu0 %v570
      %827 = vmatprep.subr.bf16.mxu0 0
      %828 = vmatpush1.bf16.msra.mxu0 %v569
      %829 = vmatprep.subr.bf16.mxu0 0
      %830 = vmatpush1.bf16.msra.mxu0 %v568
      %831 = vmatprep.subr.bf16.mxu0 0
      %832 = vmatpush1.bf16.msra.mxu0 %v567
      %833 = vmatprep.subr.bf16.mxu0 0
      %834 = vmatpush1.bf16.msra.mxu0 %v566
      %835 = vmatprep.subr.bf16.mxu0 0
      %836 = vmatpush1.bf16.msra.mxu0 %v565
      %837 = vmatprep.subr.bf16.mxu0 0
      %838 = vmatpush1.bf16.msra.mxu0 %v564
      %839 = vmatprep.subr.bf16.mxu0 0
      %840 = vmatpush2.bf16.msra.mxu0 0
      %841 = vmatprep.subr.bf16.mxu0 0
      %842 = vmatpush2.bf16.msra.mxu0 0
      %843 = vmatprep.subr.bf16.mxu0 0
      %844 = vmatpush2.bf16.msra.mxu0 0
      %845 = vmatprep.subr.bf16.mxu0 0
      %846 = vmatpush2.bf16.msra.mxu0 0
      %847 = vmatprep.subr.bf16.mxu0 0
      %848 = vmatpush2.bf16.msra.mxu0 0
      %849 = vmatprep.subr.bf16.mxu0 0
      %850 = vmatpush2.bf16.msra.mxu0 0
      %851 = vmatprep.subr.bf16.mxu0 0
      %852 = vmatpush2.bf16.msra.mxu0 0
      %853 = vmatprep.subr.bf16.mxu0 0
      %854 = vmatpush2.bf16.msra.mxu0 0
      %855 = vmatprep.mubr.bf16.mxu0 0
      %856 = vmatmul.mubr.bf16.gmra.mxu0 %v822
      %v857 = vpop.f32.mrf.mxu0
      %v858 = vadd.f32 %v460, %v857
      %v859 = vpop.f32.mrf.mxu0
      %v860 = vpop.f32.mrf.mxu0
      %v861 = vpop.f32.mrf.mxu0
      %862 = vdwg.mxu0
      %v863 = vtanh.pop %v858
      %v864 = vpack.c.bf16 %v863, %v863
      %865 = vmatprep.subr.bf16.mxu0 0
      %866 = vmatpush1.bf16.msra.mxu0 %v661
      %867 = vmatprep.subr.bf16.mxu0 0
      %868 = vmatpush1.bf16.msra.mxu0 %v660
      %869 = vmatprep.subr.bf16.mxu0 0
      %870 = vmatpush1.bf16.msra.mxu0 %v659
      %871 = vmatprep.subr.bf16.mxu0 0
      %872 = vmatpush1.bf16.msra.mxu0 %v658
      %873 = vmatprep.subr.bf16.mxu0 0
      %874 = vmatpush1.bf16.msra.mxu0 %v657
      %875 = vmatprep.subr.bf16.mxu0 0
      %876 = vmatpush1.bf16.msra.mxu0 %v656
      %877 = vmatprep.subr.bf16.mxu0 0
      %878 = vmatpush1.bf16.msra.mxu0 %v655
      %879 = vmatprep.subr.bf16.mxu0 0
      %880 = vmatpush1.bf16.msra.mxu0 %v654
      %881 = vmatprep.subr.bf16.mxu0 0
      %882 = vmatpush2.bf16.msra.mxu0 0
      %883 = vmatprep.subr.bf16.mxu0 0
      %884 = vmatpush2.bf16.msra.mxu0 0
      %885 = vmatprep.subr.bf16.mxu0 0
      %886 = vmatpush2.bf16.msra.mxu0 0
      %887 = vmatprep.subr.bf16.mxu0 0
      %888 = vmatpush2.bf16.msra.mxu0 0
      %889 = vmatprep.subr.bf16.mxu0 0
      %890 = vmatpush2.bf16.msra.mxu0 0
      %891 = vmatprep.subr.bf16.mxu0 0
      %892 = vmatpush2.bf16.msra.mxu0 0
      %893 = vmatprep.subr.bf16.mxu0 0
      %894 = vmatpush2.bf16.msra.mxu0 0
      %895 = vmatprep.subr.bf16.mxu0 0
      %896 = vmatpush2.bf16.msra.mxu0 0
      %897 = vmatprep.mubr.bf16.mxu0 0
      %898 = vmatmul.mubr.bf16.gmra.mxu0 %v864
      %v899 = vpop.f32.mrf.mxu0
      %v900 = vadd.f32 0.0, %v899
      %v901 = vpop.f32.mrf.mxu0
      %v902 = vpop.f32.mrf.mxu0
      %v903 = vpop.f32.mrf.mxu0
      %904 = vdwg.mxu0
      %905 = vmatprep.subr.bf16.mxu0 0
      %906 = vmatpush1.bf16.msra.mxu0 %v749
      %907 = vmatprep.subr.bf16.mxu0 0
      %908 = vmatpush1.bf16.msra.mxu0 %v748
      %909 = vmatprep.subr.bf16.mxu0 0
      %910 = vmatpush1.bf16.msra.mxu0 %v747
      %911 = vmatprep.subr.bf16.mxu0 0
      %912 = vmatpush1.bf16.msra.mxu0 %v746
      %913 = vmatprep.subr.bf16.mxu0 0
      %914 = vmatpush1.bf16.msra.mxu0 %v745
      %915 = vmatprep.subr.bf16.mxu0 0
      %916 = vmatpush1.bf16.msra.mxu0 %v744
      %917 = vmatprep.subr.bf16.mxu0 0
      %918 = vmatpush1.bf16.msra.mxu0 %v743
      %919 = vmatprep.subr.bf16.mxu0 0
      %920 = vmatpush1.bf16.msra.mxu0 %v742
      %921 = vmatprep.subr.bf16.mxu0 0
      %922 = vmatpush2.bf16.msra.mxu0 0
      %923 = vmatprep.subr.bf16.mxu0 0
      %924 = vmatpush2.bf16.msra.mxu0 0
      %925 = vmatprep.subr.bf16.mxu0 0
      %926 = vmatpush2.bf16.msra.mxu0 0
      %927 = vmatprep.subr.bf16.mxu0 0
      %928 = vmatpush2.bf16.msra.mxu0 0
      %929 = vmatprep.subr.bf16.mxu0 0
      %930 = vmatpush2.bf16.msra.mxu0 0
      %931 = vmatprep.subr.bf16.mxu0 0
      %932 = vmatpush2.bf16.msra.mxu0 0
      %933 = vmatprep.subr.bf16.mxu0 0
      %934 = vmatpush2.bf16.msra.mxu0 0
      %935 = vmatprep.subr.bf16.mxu0 0
      %936 = vmatpush2.bf16.msra.mxu0 0
      %937 = vmatprep.mubr.bf16.mxu0 0
      %938 = vmatmul.mubr.bf16.gmra.mxu0 %v822
      %v939 = vpop.f32.mrf.mxu0
      %v940 = vadd.f32 0.0, %v939
      %v941 = vpop.f32.mrf.mxu0
      %v942 = vpop.f32.mrf.mxu0
      %v943 = vpop.f32.mrf.mxu0
      %944 = vdwg.mxu0
      %v945 = vadd.f32 %v900, %v940
      %v946 = vadd.f32 %v945, %v467
      %v947 = vxor.u32 %v946, 2147483648
      %v948 = vmul.f32 %v947, 1.442695
      %v949 = vpow.pop %v948
      %v950 = vadd.f32 %v949, 1.0
      %v951 = vrcp.pop %v950
      %v952 = vmul.f32 1.0, %v951
      %953 = vrot.lane.b32.xlu0 %v952, 64
      %v954 = vpop.permute.xlu0 %953
      %v955 = vadd.f32 %v900, %v474
      %v956 = vadd.f32 %v940, %v481
      %v957 = vmul.f32 %v954, %v956
      %v958 = vadd.f32 %v955, %v957
      %v959 = vtanh.pop %v958
      %960 = vrot.lane.b32.xlu0 %v959, 64
      %v961 = vpop.permute.xlu0 %960
      %962 = vrot.lane.b32.xlu0 %v952, 96
      %v963 = vpop.permute.xlu0 %962
      %v964 = vsub.f32 1.0, %v963
      %v965 = vmul.f32 %v964, %v961
      %v966 = vmul.f32 %v963, %v820
      %v967 = vadd.f32 %v965, %v966
      %968 = vst [vmem:[%s451 + $0x10] sm:$0xff] %v967
      %v969 = vpack.c.bf16 %v967, %v967
      %970 = vmatprep.subr.bf16.mxu0 0
      %971 = vmatpush1.bf16.msra.mxu0 %v571
      %972 = vmatprep.subr.bf16.mxu0 0
      %973 = vmatpush1.bf16.msra.mxu0 %v570
      %974 = vmatprep.subr.bf16.mxu0 0
      %975 = vmatpush1.bf16.msra.mxu0 %v569
      %976 = vmatprep.subr.bf16.mxu0 0
      %977 = vmatpush1.bf16.msra.mxu0 %v568
      %978 = vmatprep.subr.bf16.mxu0 0
      %979 = vmatpush1.bf16.msra.mxu0 %v567
      %980 = vmatprep.subr.bf16.mxu0 0
      %981 = vmatpush1.bf16.msra.mxu0 %v566
      %982 = vmatprep.subr.bf16.mxu0 0
      %983 = vmatpush1.bf16.msra.mxu0 %v565
      %984 = vmatprep.subr.bf16.mxu0 0
      %985 = vmatpush1.bf16.msra.mxu0 %v564
      %986 = vmatprep.subr.bf16.mxu0 0
      %987 = vmatpush2.bf16.msra.mxu0 0
      %988 = vmatprep.subr.bf16.mxu0 0
      %989 = vmatpush2.bf16.msra.mxu0 0
      %990 = vmatprep.subr.bf16.mxu0 0
      %991 = vmatpush2.bf16.msra.mxu0 0
      %992 = vmatprep.subr.bf16.mxu0 0
      %993 = vmatpush2.bf16.msra.mxu0 0
      %994 = vmatprep.subr.bf16.mxu0 0
      %995 = vmatpush2.bf16.msra.mxu0 0
      %996 = vmatprep.subr.bf16.mxu0 0
      %997 = vmatpush2.bf16.msra.mxu0 0
      %998 = vmatprep.subr.bf16.mxu0 0
      %999 = vmatpush2.bf16.msra.mxu0 0
      %1000 = vmatprep.subr.bf16.mxu0 0
      %1001 = vmatpush2.bf16.msra.mxu0 0
      %1002 = vmatprep.mubr.bf16.mxu0 0
      %1003 = vmatmul.mubr.bf16.gmra.mxu0 %v969
      %v1004 = vpop.f32.mrf.mxu0
      %v1005 = vadd.f32 %v460, %v1004
      %v1006 = vpop.f32.mrf.mxu0
      %v1007 = vpop.f32.mrf.mxu0
      %v1008 = vpop.f32.mrf.mxu0
      %1009 = vdwg.mxu0
      %v1010 = vtanh.pop %v1005
      %v1011 = vpack.c.bf16 %v1010, %v1010
      %1012 = vmatprep.subr.bf16.mxu0 0
      %1013 = vmatpush1.bf16.msra.mxu0 %v661
      %1014 = vmatprep.subr.bf16.mxu0 0
      %1015 = vmatpush1.bf16.msra.mxu0 %v660
      %1016 = vmatprep.subr.bf16.mxu0 0
      %1017 = vmatpush1.bf16.msra.mxu0 %v659
      %1018 = vmatprep.subr.bf16.mxu0 0
      %1019 = vmatpush1.bf16.msra.mxu0 %v658
      %1020 = vmatprep.subr.bf16.mxu0 0
      %1021 = vmatpush1.bf16.msra.mxu0 %v657
      %1022 = vmatprep.subr.bf16.mxu0 0
      %1023 = vmatpush1.bf16.msra.mxu0 %v656
      %1024 = vmatprep.subr.bf16.mxu0 0
      %1025 = vmatpush1.bf16.msra.mxu0 %v655
      %1026 = vmatprep.subr.bf16.mxu0 0
      %1027 = vmatpush1.bf16.msra.mxu0 %v654
      %1028 = vmatprep.subr.bf16.mxu0 0
      %1029 = vmatpush2.bf16.msra.mxu0 0
      %1030 = vmatprep.subr.bf16.mxu0 0
      %1031 = vmatpush2.bf16.msra.mxu0 0
      %1032 = vmatprep.subr.bf16.mxu0 0
      %1033 = vmatpush2.bf16.msra.mxu0 0
      %1034 = vmatprep.subr.bf16.mxu0 0
      %1035 = vmatpush2.bf16.msra.mxu0 0
      %1036 = vmatprep.subr.bf16.mxu0 0
      %1037 = vmatpush2.bf16.msra.mxu0 0
      %1038 = vmatprep.subr.bf16.mxu0 0
      %1039 = vmatpush2.bf16.msra.mxu0 0
      %1040 = vmatprep.subr.bf16.mxu0 0
      %1041 = vmatpush2.bf16.msra.mxu0 0
      %1042 = vmatprep.subr.bf16.mxu0 0
      %1043 = vmatpush2.bf16.msra.mxu0 0
      %1044 = vmatprep.mubr.bf16.mxu0 0
      %1045 = vmatmul.mubr.bf16.gmra.mxu0 %v1011
      %v1046 = vpop.f32.mrf.mxu0
      %v1047 = vadd.f32 0.0, %v1046
      %v1048 = vpop.f32.mrf.mxu0
      %v1049 = vpop.f32.mrf.mxu0
      %v1050 = vpop.f32.mrf.mxu0
      %1051 = vdwg.mxu0
      %1052 = vmatprep.subr.bf16.mxu0 0
      %1053 = vmatpush1.bf16.msra.mxu0 %v749
      %1054 = vmatprep.subr.bf16.mxu0 0
      %1055 = vmatpush1.bf16.msra.mxu0 %v748
      %1056 = vmatprep.subr.bf16.mxu0 0
      %1057 = vmatpush1.bf16.msra.mxu0 %v747
      %1058 = vmatprep.subr.bf16.mxu0 0
      %1059 = vmatpush1.bf16.msra.mxu0 %v746
      %1060 = vmatprep.subr.bf16.mxu0 0
      %1061 = vmatpush1.bf16.msra.mxu0 %v745
      %1062 = vmatprep.subr.bf16.mxu0 0
      %1063 = vmatpush1.bf16.msra.mxu0 %v744
      %1064 = vmatprep.subr.bf16.mxu0 0
      %1065 = vmatpush1.bf16.msra.mxu0 %v743
      %1066 = vmatprep.subr.bf16.mxu0 0
      %1067 = vmatpush1.bf16.msra.mxu0 %v742
      %1068 = vmatprep.subr.bf16.mxu0 0
      %1069 = vmatpush2.bf16.msra.mxu0 0
      %1070 = vmatprep.subr.bf16.mxu0 0
      %1071 = vmatpush2.bf16.msra.mxu0 0
      %1072 = vmatprep.subr.bf16.mxu0 0
      %1073 = vmatpush2.bf16.msra.mxu0 0
      %1074 = vmatprep.subr.bf16.mxu0 0
      %1075 = vmatpush2.bf16.msra.mxu0 0
      %1076 = vmatprep.subr.bf16.mxu0 0
      %1077 = vmatpush2.bf16.msra.mxu0 0
      %1078 = vmatprep.subr.bf16.mxu0 0
      %1079 = vmatpush2.bf16.msra.mxu0 0
      %1080 = vmatprep.subr.bf16.mxu0 0
      %1081 = vmatpush2.bf16.msra.mxu0 0
      %1082 = vmatprep.subr.bf16.mxu0 0
      %1083 = vmatpush2.bf16.msra.mxu0 0
      %1084 = vmatprep.mubr.bf16.mxu0 0
      %1085 = vmatmul.mubr.bf16.gmra.mxu0 %v969
      %v1086 = vpop.f32.mrf.mxu0
      %v1087 = vadd.f32 0.0, %v1086
      %v1088 = vpop.f32.mrf.mxu0
      %v1089 = vpop.f32.mrf.mxu0
      %v1090 = vpop.f32.mrf.mxu0
      %1091 = vdwg.mxu0
      %v1092 = vadd.f32 %v1047, %v1087
      %v1093 = vadd.f32 %v1092, %v467
      %v1094 = vxor.u32 %v1093, 2147483648
      %v1095 = vmul.f32 %v1094, 1.442695
      %v1096 = vpow.pop %v1095
      %v1097 = vadd.f32 %v1096, 1.0
      %v1098 = vrcp.pop %v1097
      %v1099 = vmul.f32 1.0, %v1098
      %1100 = vrot.lane.b32.xlu0 %v1099, 64
      %v1101 = vpop.permute.xlu0 %1100
      %v1102 = vadd.f32 %v1047, %v474
      %v1103 = vadd.f32 %v1087, %v481
      %v1104 = vmul.f32 %v1101, %v1103
      %v1105 = vadd.f32 %v1102, %v1104
      %v1106 = vtanh.pop %v1105
      %1107 = vrot.lane.b32.xlu0 %v1106, 64
      %v1108 = vpop.permute.xlu0 %1107
      %1109 = vrot.lane.b32.xlu0 %v1099, 96
      %v1110 = vpop.permute.xlu0 %1109
      %v1111 = vsub.f32 1.0, %v1110
      %v1112 = vmul.f32 %v1111, %v1108
      %v1113 = vmul.f32 %v1110, %v967
      %v1114 = vadd.f32 %v1112, %v1113
      %1115 = vst [vmem:[%s451 + $0x18] sm:$0xff] %v1114
      %p1116 = scmp.lt.s32.totalorder %s23, 1
      %s1117 = scalar_select %p1116, %s23, 1
      %p1118 = scmp.lt.s32.totalorder %s24, 0
      %s1119 = scalar_select %p1118, %s24, 0
      %s1120 = smul.addr %s1119, 4
      %s1121 = smul.addr %s1117, 4
      %s1122 = sadd.s32 %s1120, %s1121
      %s1123 = smul.addr %s1122, 8
      %s1124 = scalar_lea.vmem %s8, %s1123
      // Predicated region
      $region53: #{meta_gru_forward.1} parent=51 // pred_check
        %p1125 = pneg %p261
      $region54: #{meta_gru_forward.1} parent=51 // pred_check_branch
        %1127 = sbr.rel (%p1125) target = $region56
      $region55: #{meta_gru_forward.1} parent=51 // pred_region
        _
      $region56: #{meta_gru_forward.1} parent=51 // pred_fallthru
        _
    $region52: #{meta_gru_forward.1} parent=5 // pred_fallthru
      _
    %p1128 = scmp.le.s32.totalorder 2, %s14
    // Predicated region
    $region57: #{meta_gru_forward.1} parent=5 // pred_check
      %p1129 = pneg %p1128
    $region58: #{meta_gru_forward.1} parent=5 // pred_check_branch
      %1131 = sbr.rel (%p1129) target = $region60
    $region59: #{meta_gru_forward.1} parent=5 // pred_region
      %s1132 = ssub.s32 %s14, 2
      // Predicated region
      $region61: #{meta_gru_forward.1} parent=59 // pred_check
        %p1133 = pneg %p267
      $region62: #{meta_gru_forward.1} parent=59 // pred_check_branch
        %1135 = sbr.rel (%p1133) target = $region64
      $region63: #{meta_gru_forward.1} parent=59 // pred_region
        %p1136 = scmp.lt.s32.totalorder %s25, 1
        %s1137 = scalar_select %p1136, %s25, 1
        %p1138 = scmp.lt.s32.totalorder %s26, 0
        %s1139 = scalar_select %p1138, %s26, 0
        %s1140 = smul.addr %s1139, 4
        %s1141 = smul.addr %s1137, 4
        %s1142 = sadd.s32 %s1140, %s1141
        %s1143 = smul.addr %s1142, 8
        %s1144 = scalar_lea.vmem %s8, %s1143
      $region64: #{meta_gru_forward.1} parent=59 // pred_fallthru
        _
    $region60: #{meta_gru_forward.1} parent=5 // pred_fallthru
      _
  $region6: #{meta_gru_forward.1} parent=0 // loop_footer
    %s18 = sadd.s32 1, %s14
  $region7: #{meta_gru_forward.1} parent=0 // loop_footer_branch
    %13 = sbr.rel target = $region3
  $region8: #{meta_gru_forward.1} parent=0 // loop_exit
    _

</llo_original>
